<compile_context>
chip_gen: v5e
topology: v5e:2x2
jax: 0.10.0
libtpu: 0.0.40
codegen_flags: <defaults>
</compile_context>

<pallas_src>
from functools import partial

import numpy as np
import jax
import jax.numpy as jnp
from jax import lax
from jax.experimental import pallas as pl
from jax.experimental.pallas import tpu as pltpu

EPS = 1e-5  # nn.InstanceNorm2d default


def _sublane_multiple(dtype):
    # sublane tile is 8 rows of 32-bit; packed dtypes pack along sublanes.
    return 8 * max(1, 4 // jnp.dtype(dtype).itemsize)   # f32 -> 8, bf16 -> 16


def _pack_conv3x3_weight(w, c_pad, dtype):
    """(Cout, Cin, 3, 3) -> (Cout, 9*c_pad); column = (ky*3+kx)*c_pad + cin."""
    cout, cin = w.shape[0], w.shape[1]
    w_t = jnp.transpose(w, (0, 2, 3, 1))                         # (Cout,3,3,Cin)
    w_t = jnp.pad(w_t, ((0, 0), (0, 0), (0, 0), (0, c_pad - cin)))
    return w_t.reshape(cout, 9 * c_pad).astype(dtype)


# ---------------------------------------------------------------------------
# in-kernel helper: dilated 3x3 conv as a single im2col matmul
# ---------------------------------------------------------------------------
def _dilated_conv3x3(r, w_ref, col_ref, pos, ww, d, H, W, HW, Cin, Cp, col_dtype):
    """3x3 conv, dilation=d, padding=d (same spatial size) on a (Cin, HW) tile.

    r:       (Cin, HW) f32 value
    w_ref:   (Cout, 9*Cp) VMEM ref, column = (ky*3+kx)*Cp + cin (pads are zero)
    col_ref: (9*Cp, HW) VMEM im2col scratch (col_dtype)
    pos:     (1, HW) int32 flat spatial index (for vertical border masks)
    ww:      (1, HW) int32 within-row index  (for horizontal border masks)
    """
    for ky in range(3):
        for kx in range(3):
            t = ky * 3 + kx
            dy, dx = (ky - 1) * d, (kx - 1) * d
            s = dy * W + dx                                  # flat spatial shift
            if s == 0:
                tap = r                                      # center tap: no mask
            else:
                rolled = pltpu.roll(r, shift=(-s) % HW, axis=1)   # out[i]=r[i+s]
                conds = []
                if dy < 0:
                    conds.append(pos >= (-dy) * W)           # h + dy >= 0
                if dy > 0:
                    conds.append(pos < (H - dy) * W)         # h + dy < H
                if dx < 0:
                    conds.append(ww >= -dx)                  # w + dx >= 0
                if dx > 0:
                    conds.append(ww < W - dx)                # w + dx < W
                valid = conds[0]
                for c in conds[1:]:
                    valid = jnp.logical_and(valid, c)
                tap = jnp.where(valid, rolled, 0.0)
            col_ref[t * Cp:t * Cp + Cin, :] = tap.astype(col_dtype)
    # single fused matmul: (Cout, 9*Cp) @ (9*Cp, HW) -> (Cout, HW), f32 acc
    return jnp.dot(w_ref[...], col_ref[...], preferred_element_type=jnp.float32)


# ---------------------------------------------------------------------------
# Pallas kernel: full forward for one batch element
# ---------------------------------------------------------------------------
def _block_kernel(d2, d4, H, W, C, Cp, compute_dtype, col_dtype,
                  x_ref, w1_ref, w2_ref, w4_ref, aff_ref, ww_ref,
                  o_ref, col_ref):
    HW = H * W
    inv_hw = jnp.float32(1.0 / HW)

    # Zero the (Cp - C) padding rows of every tap slab so the zero weight
    # columns never see garbage (NaN * 0 = NaN).  Done unconditionally every
    # step (safe under megacore grid sharding); this code is absent entirely
    # when C is already sublane-tile aligned (production channel counts).
    if Cp > C:
        zpad = jnp.zeros((Cp - C, HW), col_dtype)
        for t in range(9):
            col_ref[t * Cp + C:(t + 1) * Cp, :] = zpad

    pos = lax.broadcasted_iota(jnp.int32, (1, HW), 1)   # flat spatial index
    ww = ww_ref[...]                                    # within-row index

    xb = x_ref[0].astype(jnp.float32)                   # (C, HW), f32 for stats

    # ---- shared InstanceNorm statistics of x (IN1 and IN2 normalize the same
    #      tensor; only gamma/beta differ) ------------------------------------
    mean = jnp.sum(xb, axis=1, keepdims=True) * inv_hw
    xc = xb - mean
    var = jnp.sum(xc * xc, axis=1, keepdims=True) * inv_hw
    xhat = xc * lax.rsqrt(var + EPS)                    # (C, HW)

    g1 = aff_ref[:, 0:1]; b1 = aff_ref[:, 1:2]
    g2 = aff_ref[:, 2:3]; b2 = aff_ref[:, 3:4]
    g4 = aff_ref[:, 4:5]; b4 = aff_ref[:, 5:6]

    # ---- branch 1: IN1 -> ReLU -> 1x1 conv; accumulate into output early ----
    r1 = jnp.maximum(xhat * g1 + b1, 0.0).astype(compute_dtype)
    out1 = jnp.dot(w1_ref[...], r1, preferred_element_type=jnp.float32)
    o_ref[0] = (xb + out1).astype(o_ref.dtype)          # xb/out1 released here

    # ---- branch 2: IN2 -> ReLU -> conv(d2) -> IN4 -> ReLU -> conv(d4) -------
    r2 = jnp.maximum(xhat * g2 + b2, 0.0)
    c2 = _dilated_conv3x3(r2, w2_ref, col_ref, pos, ww, d2, H, W, HW, C, Cp,
                          col_dtype)

    m = jnp.sum(c2, axis=1, keepdims=True) * inv_hw
    cc = c2 - m
    v = jnp.sum(cc * cc, axis=1, keepdims=True) * inv_hw
    r4 = jnp.maximum(cc * lax.rsqrt(v + EPS) * g4 + b4, 0.0)
    c4 = _dilated_conv3x3(r4, w4_ref, col_ref, pos, ww, d4, H, W, HW, C, Cp,
                          col_dtype)

    o_ref[0] = (o_ref[0].astype(jnp.float32) + c4).astype(o_ref.dtype)


# ---------------------------------------------------------------------------
# host-side wrapper
# ---------------------------------------------------------------------------
def four_dilate_conv_res_block_in(x, params, d2, d4,
                                  compute_dtype=jnp.bfloat16,
                                  col_dtype=jnp.bfloat16):
    B, C, H, W = x.shape
    w1, w2, w4, g1, b1, g2, b2, g4, b4 = params
    Cout = w1.shape[0]
    assert Cout == C, "residual add requires in_channels == out_channels"
    HW = H * W

    # x / out carried in bf16 end-to-end when the MXU path is bf16
    io_dtype = (jnp.float32 if jnp.dtype(compute_dtype) == jnp.dtype(jnp.float32)
                else jnp.dtype(compute_dtype))

    # channel padding so every tap slab in the im2col buffer is tile-aligned
    mult = _sublane_multiple(col_dtype)
    Cp = ((C + mult - 1) // mult) * mult

    # matmul-friendly weight / parameter prep (plain JAX glue, outside kernel)
    w1_m = w1.reshape(Cout, C).astype(compute_dtype)                     # (O, I)
    w2_m = _pack_conv3x3_weight(w2, Cp, compute_dtype)                   # (O, 9*Cp)
    w4_m = _pack_conv3x3_weight(w4, Cp, compute_dtype)                   # (O, 9*Cp)
    aff = jnp.stack([g1, b1, g2, b2, g4, b4], axis=1).astype(jnp.float32)  # (C, 6)
    ww_idx = jnp.asarray((np.arange(HW) % W).astype(np.int32)).reshape(1, HW)
    x_flat = x.reshape(B, C, HW).astype(io_dtype)                        # lane-dense

    # grid-invariant inputs: single-buffer (their index_map is constant in b)
    def const_spec(shape):
        return pl.BlockSpec(shape, lambda b: (0,) * len(shape),
                            pipeline_mode=pl.Buffered(1))

    kernel = partial(_block_kernel, d2, d4, H, W, C, Cp, compute_dtype, col_dtype)

    grid_spec = pltpu.PrefetchScalarGridSpec(
        num_scalar_prefetch=0,
        grid=(B,),
        in_specs=[
            pl.BlockSpec((1, C, HW), lambda b: (b, 0, 0)),   # x, one batch elem
            const_spec((Cout, C)),                           # conv1 weight
            const_spec((Cout, 9 * Cp)),                      # conv2 weight (im2col)
            const_spec((Cout, 9 * Cp)),                      # conv4 weight (im2col)
            const_spec((C, 6)),                              # [g1 b1 g2 b2 g4 b4]
            const_spec((1, HW)),                             # within-row index
        ],
        out_specs=pl.BlockSpec((1, Cout, HW), lambda b: (b, 0, 0)),
        scratch_shapes=[
            pltpu.VMEM((9 * Cp, HW), col_dtype),             # shared im2col buffer
        ],
    )

    # vmem limit from the actual per-step footprint, capped per generation
    def nbytes(shape, dt):
        return int(np.prod(shape)) * jnp.dtype(dt).itemsize

    footprint = (
        2 * nbytes((1, C, HW), io_dtype)          # x block (double-buffered)
        + 2 * nbytes((1, Cout, HW), io_dtype)     # out block (double-buffered)
        + nbytes((9 * Cp, HW), col_dtype)         # im2col scratch
        + nbytes((Cout, C), compute_dtype)        # single-buffered weights/params
        + 2 * nbytes((Cout, 9 * Cp), compute_dtype)
        + nbytes((max(C, 8), 128), jnp.float32)   # aff (tile-padded estimate)
        + nbytes((8, HW), jnp.int32))             # ww index (tile-padded estimate)
    try:
        vmem_cap = int(pltpu.get_tpu_info().vmem_capacity_bytes)
    except Exception:
        vmem_cap = 128 << 20
    cap = min(100 << 20, int(0.75 * vmem_cap))    # ~96 MiB v5e/v6e, ~48 MiB v7x
    vmem_limit = int(min(max(2 * footprint + (4 << 20), 32 << 20), cap))

    out = pl.pallas_call(
        kernel,
        out_shape=jax.ShapeDtypeStruct((B, Cout, HW), io_dtype),
        grid_spec=grid_spec,
        compiler_params=pltpu.CompilerParams(
            dimension_semantics=("parallel",),    # independent batch elements
            vmem_limit_bytes=vmem_limit),
    )(x_flat, w1_m, w2_m, w4_m, aff, ww_idx)

    return out.reshape(B, Cout, H, W)


# ---------------------------------------------------------------------------
# pure-JAX reference (mirrors the PyTorch forward exactly)
# ---------------------------------------------------------------------------
def _reference(x, params, d2, d4):
    w1, w2, w4, g1, b1, g2, b2, g4, b4 = params

    def inorm(v, g, b):
        m = jnp.mean(v, axis=(2, 3), keepdims=True)
        var = jnp.mean(jnp.square(v - m), axis=(2, 3), keepdims=True)
        return (v - m) / jnp.sqrt(var + EPS) * g[None, :, None, None] \
            + b[None, :, None, None]

    relu = lambda t: jnp.maximum(t, 0.0)
    dn = ('NCHW', 'OIHW', 'NCHW')

    out1 = lax.conv_general_dilated(relu(inorm(x, g1, b1)), w1, (1, 1), 'VALID',
                                    dimension_numbers=dn)
    out2 = lax.conv_general_dilated(relu(inorm(x, g2, b2)), w2, (1, 1),
                                    [(d2, d2), (d2, d2)], rhs_dilation=(d2, d2),
                                    dimension_numbers=dn)
    out2 = lax.conv_general_dilated(relu(inorm(out2, g4, b4)), w4, (1, 1),
                                    [(d4, d4), (d4, d4)], rhs_dilation=(d4, d4),
                                    dimension_numbers=dn)
    return x + out1 + out2


# ---------------------------------------------------------------------------
if __name__ == "__main__":
    B, C, H, W = 2, 4, 16, 16
    d2, d4 = 1, 2

    key = jax.random.PRNGKey(0)
    ks = jax.random.split(key, 10)
    x = jax.random.normal(ks[0], (B, C, H, W), jnp.float32)

    # deterministic synthetic parameters (shapes match the PyTorch module)
    w1 = 0.3 * jax.random.normal(ks[1], (C, C, 1, 1), jnp.float32)   # conv1
    w2 = 0.2 * jax.random.normal(ks[2], (C, C, 3, 3), jnp.float32)   # conv2
    w4 = 0.2 * jax.random.normal(ks[3], (C, C, 3, 3), jnp.float32)   # conv4
    g1 = 1.0 + 0.1 * jax.random.normal(ks[4], (C,), jnp.float32)
    b1 = 0.1 * jax.random.normal(ks[5], (C,), jnp.float32)
    g2 = 1.0 + 0.1 * jax.random.normal(ks[6], (C,), jnp.float32)
    b2 = 0.1 * jax.random.normal(ks[7], (C,), jnp.float32)
    g4 = 1.0 + 0.1 * jax.random.normal(ks[8], (C,), jnp.float32)
    b4 = 0.1 * jax.random.normal(ks[9], (C,), jnp.float32)
    params = (w1, w2, w4, g1, b1, g2, b2, g4, b4)

    ref = _reference(x, params, d2, d4)

    # strict structural check: f32 MXU operands + f32 im2col scratch + f32 I/O
    out_f32 = four_dilate_conv_res_block_in(x, params, d2, d4,
                                            compute_dtype=jnp.float32,
                                            col_dtype=jnp.float32)
    out_f32 = jax.block_until_ready(out_f32)
    np.testing.assert_allclose(np.asarray(out_f32), np.asarray(ref),
                               rtol=1e-4, atol=1e-4)

    # default perf path: bf16 MXU operands, bf16 im2col scratch, bf16 x/out I/O
    # (f32 accumulation and f32 InstanceNorm statistics inside the kernel)
    out_bf16 = four_dilate_conv_res_block_in(x, params, d2, d4)
    out_bf16 = jax.block_until_ready(out_bf16)
    np.testing.assert_allclose(np.asarray(out_bf16).astype(np.float32),
                               np.asarray(ref), rtol=0.2, atol=0.2)

    print("KERNEL_OK")
</pallas_src>

<mosaic_0001>
module attributes {stable_mosaic.version = 11 : i64} {
  func.func @_block_kernel(%arg0: i32, %arg1: memref<1x4x256xf32, #tpu.memory_space<vmem>>, %arg2: memref<4x4xf32, #tpu.memory_space<vmem>>, %arg3: memref<4x72xf32, #tpu.memory_space<vmem>>, %arg4: memref<4x72xf32, #tpu.memory_space<vmem>>, %arg5: memref<4x6xf32, #tpu.memory_space<vmem>>, %arg6: memref<1x256xi32, #tpu.memory_space<vmem>>, %arg7: memref<1x4x256xf32, #tpu.memory_space<vmem>>, %arg8: memref<72x256xf32, #tpu.memory_space<vmem>>) attributes {dimension_semantics = [#tpu.dimension_semantics<parallel>], iteration_bounds = array<i64: 2>, scalar_prefetch = 0 : i64, scratch_operands = 1 : i64, tpu.core_type = #tpu.core_type<tc>, window_params = [{transform_indices = @transform_0, window_bounds = array<i64: 1, 4, 256>}, {pipeline_mode = #tpu.pipeline_mode<synchronous>, transform_indices = @transform_1, window_bounds = array<i64: 4, 4>}, {pipeline_mode = #tpu.pipeline_mode<synchronous>, transform_indices = @transform_2, window_bounds = array<i64: 4, 72>}, {pipeline_mode = #tpu.pipeline_mode<synchronous>, transform_indices = @transform_3, window_bounds = array<i64: 4, 72>}, {pipeline_mode = #tpu.pipeline_mode<synchronous>, transform_indices = @transform_4, window_bounds = array<i64: 4, 6>}, {pipeline_mode = #tpu.pipeline_mode<synchronous>, transform_indices = @transform_5, window_bounds = array<i64: 1, 256>}, {transform_indices = @transform_6, window_bounds = array<i64: 1, 4, 256>}]} {
    %cst = arith.constant 0.000000e+00 : f32
    %0 = vector.broadcast %cst : f32 to vector<4x256xf32>
    %c4 = arith.constant 4 : index
    %c0 = arith.constant 0 : index
    %1 = vector.load %arg8[%c4, %c0] : memref<72x256xf32, #tpu.memory_space<vmem>>, vector<4x256xf32>
    tpu.vector_store %arg8[%c4, %c0], %0 {strides = array<i32>} : memref<72x256xf32, #tpu.memory_space<vmem>>, vector<4x256xf32>,
    %c12 = arith.constant 12 : index
    %c0_0 = arith.constant 0 : index
    %2 = vector.load %arg8[%c12, %c0_0] : memref<72x256xf32, #tpu.memory_space<vmem>>, vector<4x256xf32>
    tpu.vector_store %arg8[%c12, %c0_0], %0 {strides = array<i32>} : memref<72x256xf32, #tpu.memory_space<vmem>>, vector<4x256xf32>,
    %c20 = arith.constant 20 : index
    %c0_1 = arith.constant 0 : index
    %3 = vector.load %arg8[%c20, %c0_1] : memref<72x256xf32, #tpu.memory_space<vmem>>, vector<4x256xf32>
    tpu.vector_store %arg8[%c20, %c0_1], %0 {strides = array<i32>} : memref<72x256xf32, #tpu.memory_space<vmem>>, vector<4x256xf32>,
    %c28 = arith.constant 28 : index
    %c0_2 = arith.constant 0 : index
    %4 = vector.load %arg8[%c28, %c0_2] : memref<72x256xf32, #tpu.memory_space<vmem>>, vector<4x256xf32>
    tpu.vector_store %arg8[%c28, %c0_2], %0 {strides = array<i32>} : memref<72x256xf32, #tpu.memory_space<vmem>>, vector<4x256xf32>,
    %c36 = arith.constant 36 : index
    %c0_3 = arith.constant 0 : index
    %5 = vector.load %arg8[%c36, %c0_3] : memref<72x256xf32, #tpu.memory_space<vmem>>, vector<4x256xf32>
    tpu.vector_store %arg8[%c36, %c0_3], %0 {strides = array<i32>} : memref<72x256xf32, #tpu.memory_space<vmem>>, vector<4x256xf32>,
    %c44 = arith.constant 44 : index
    %c0_4 = arith.constant 0 : index
    %6 = vector.load %arg8[%c44, %c0_4] : memref<72x256xf32, #tpu.memory_space<vmem>>, vector<4x256xf32>
    tpu.vector_store %arg8[%c44, %c0_4], %0 {strides = array<i32>} : memref<72x256xf32, #tpu.memory_space<vmem>>, vector<4x256xf32>,
    %c52 = arith.constant 52 : index
    %c0_5 = arith.constant 0 : index
    %7 = vector.load %arg8[%c52, %c0_5] : memref<72x256xf32, #tpu.memory_space<vmem>>, vector<4x256xf32>
    tpu.vector_store %arg8[%c52, %c0_5], %0 {strides = array<i32>} : memref<72x256xf32, #tpu.memory_space<vmem>>, vector<4x256xf32>,
    %c60 = arith.constant 60 : index
    %c0_6 = arith.constant 0 : index
    %8 = vector.load %arg8[%c60, %c0_6] : memref<72x256xf32, #tpu.memory_space<vmem>>, vector<4x256xf32>
    tpu.vector_store %arg8[%c60, %c0_6], %0 {strides = array<i32>} : memref<72x256xf32, #tpu.memory_space<vmem>>, vector<4x256xf32>,
    %c68 = arith.constant 68 : index
    %c0_7 = arith.constant 0 : index
    %9 = vector.load %arg8[%c68, %c0_7] : memref<72x256xf32, #tpu.memory_space<vmem>>, vector<4x256xf32>
    tpu.vector_store %arg8[%c68, %c0_7], %0 {strides = array<i32>} : memref<72x256xf32, #tpu.memory_space<vmem>>, vector<4x256xf32>,
    %10 = tpu.iota {dimensions = array<i32: 1>} : vector<1x256xi32>
    %c0_8 = arith.constant 0 : index
    %c0_9 = arith.constant 0 : index
    %11 = vector.load %arg6[%c0_8, %c0_9] : memref<1x256xi32, #tpu.memory_space<vmem>>, vector<1x256xi32>
    %c0_10 = arith.constant 0 : index
    %c0_11 = arith.constant 0 : index
    %c0_12 = arith.constant 0 : index
    %12 = vector.load %arg1[%c0_10, %c0_11, %c0_12] : memref<1x4x256xf32, #tpu.memory_space<vmem>>, vector<1x4x256xf32>
    %13 = vector.shape_cast %12 : vector<1x4x256xf32> to vector<4x256xf32>
    %cst_13 = arith.constant dense<0.000000e+00> : vector<4xf32>
    %14 = vector.multi_reduction <add>, %13, %cst_13 [1] : vector<4x256xf32> to vector<4xf32>
    %15 = vector.shape_cast %14 : vector<4xf32> to vector<4x1xf32>
    %cst_14 = arith.constant 3.906250e-03 : f32
    %16 = vector.broadcast %cst_14 : f32 to vector<4x1xf32>
    %17 = arith.mulf %15, %16 : vector<4x1xf32>
    %18 = vector.broadcast %17 : vector<4x1xf32> to vector<4x256xf32>
    %19 = arith.subf %13, %18 : vector<4x256xf32>
    %20 = arith.mulf %19, %19 : vector<4x256xf32>
    %cst_15 = arith.constant dense<0.000000e+00> : vector<4xf32>
    %21 = vector.multi_reduction <add>, %20, %cst_15 [1] : vector<4x256xf32> to vector<4xf32>
    %22 = vector.shape_cast %21 : vector<4xf32> to vector<4x1xf32>
    %cst_16 = arith.constant 3.906250e-03 : f32
    %23 = vector.broadcast %cst_16 : f32 to vector<4x1xf32>
    %24 = arith.mulf %22, %23 : vector<4x1xf32>
    %cst_17 = arith.constant 9.99999974E-6 : f32
    %25 = vector.broadcast %cst_17 : f32 to vector<4x1xf32>
    %26 = arith.addf %24, %25 : vector<4x1xf32>
    %27 = math.rsqrt %26 : vector<4x1xf32>
    %28 = vector.broadcast %27 : vector<4x1xf32> to vector<4x256xf32>
    %29 = arith.mulf %19, %28 : vector<4x256xf32>
    %c0_18 = arith.constant 0 : index
    %c0_19 = arith.constant 0 : index
    %30 = vector.load %arg5[%c0_18, %c0_19] : memref<4x6xf32, #tpu.memory_space<vmem>>, vector<4x1xf32>
    %c0_20 = arith.constant 0 : index
    %c1 = arith.constant 1 : index
    %31 = vector.load %arg5[%c0_20, %c1] : memref<4x6xf32, #tpu.memory_space<vmem>>, vector<4x1xf32>
    %c0_21 = arith.constant 0 : index
    %c2 = arith.constant 2 : index
    %32 = vector.load %arg5[%c0_21, %c2] : memref<4x6xf32, #tpu.memory_space<vmem>>, vector<4x1xf32>
    %c0_22 = arith.constant 0 : index
    %c3 = arith.constant 3 : index
    %33 = vector.load %arg5[%c0_22, %c3] : memref<4x6xf32, #tpu.memory_space<vmem>>, vector<4x1xf32>
    %c0_23 = arith.constant 0 : index
    %c4_24 = arith.constant 4 : index
    %34 = vector.load %arg5[%c0_23, %c4_24] : memref<4x6xf32, #tpu.memory_space<vmem>>, vector<4x1xf32>
    %c0_25 = arith.constant 0 : index
    %c5 = arith.constant 5 : index
    %35 = vector.load %arg5[%c0_25, %c5] : memref<4x6xf32, #tpu.memory_space<vmem>>, vector<4x1xf32>
    %36 = vector.broadcast %30 : vector<4x1xf32> to vector<4x256xf32>
    %37 = arith.mulf %29, %36 : vector<4x256xf32>
    %38 = vector.broadcast %31 : vector<4x1xf32> to vector<4x256xf32>
    %39 = arith.addf %37, %38 : vector<4x256xf32>
    %cst_26 = arith.constant 0.000000e+00 : f32
    %40 = vector.broadcast %cst_26 : f32 to vector<4x256xf32>
    %41 = arith.maximumf %39, %40 : vector<4x256xf32>
    %c0_27 = arith.constant 0 : index
    %c0_28 = arith.constant 0 : index
    %42 = vector.load %arg2[%c0_27, %c0_28] : memref<4x4xf32, #tpu.memory_space<vmem>>, vector<4x4xf32>
    %cst_29 = arith.constant dense<0.000000e+00> : vector<4x256xf32>
    %43 = tpu.matmul %42, %41, %cst_29 {dimension_numbers = #tpu.dot_dimension_numbers<[1], [0], [0], [1], [0, 0, 1, 1], [], []>} : vector<4x4xf32>, vector<4x256xf32>, vector<4x256xf32> -> vector<4x256xf32>
    %44 = arith.addf %13, %43 : vector<4x256xf32>
    %c0_30 = arith.constant 0 : index
    %c0_31 = arith.constant 0 : index
    %c0_32 = arith.constant 0 : index
    %45 = vector.load %arg7[%c0_30, %c0_31, %c0_32] : memref<1x4x256xf32, #tpu.memory_space<vmem>>, vector<1x4x256xf32>
    %46 = vector.shape_cast %45 : vector<1x4x256xf32> to vector<4x256xf32>
    %47 = vector.shape_cast %44 : vector<4x256xf32> to vector<1x4x256xf32>
    tpu.vector_store %arg7[%c0_30, %c0_31, %c0_32], %47 {strides = array<i32>} : memref<1x4x256xf32, #tpu.memory_space<vmem>>, vector<1x4x256xf32>,
    %48 = vector.broadcast %32 : vector<4x1xf32> to vector<4x256xf32>
    %49 = arith.mulf %29, %48 : vector<4x256xf32>
    %50 = vector.broadcast %33 : vector<4x1xf32> to vector<4x256xf32>
    %51 = arith.addf %49, %50 : vector<4x256xf32>
    %cst_33 = arith.constant 0.000000e+00 : f32
    %52 = vector.broadcast %cst_33 : f32 to vector<4x256xf32>
    %53 = arith.maximumf %51, %52 : vector<4x256xf32>
    %c17_i32 = arith.constant 17 : i32
    %54 = tpu.dynamic_rotate %53 by %c17_i32 dim 1 : vector<4x256xf32>, i32 -> vector<4x256xf32>
    %c16_i32 = arith.constant 16 : i32
    %55 = vector.broadcast %c16_i32 : i32 to vector<1x256xi32>
    %56 = arith.cmpi sge, %10, %55 : vector<1x256xi32>
    %c1_i32 = arith.constant 1 : i32
    %57 = vector.broadcast %c1_i32 : i32 to vector<1x256xi32>
    %58 = arith.cmpi sge, %11, %57 : vector<1x256xi32>
    %59 = arith.andi %56, %58 : vector<1x256xi1>
    %cst_34 = arith.constant 0.000000e+00 : f32
    %60 = vector.shape_cast %59 : vector<1x256xi1> to vector<1x256xi1>
    %61 = vector.broadcast %60 : vector<1x256xi1> to vector<4x256xi1>
    %62 = vector.broadcast %cst_34 : f32 to vector<4x256xf32>
    %63 = arith.select %61, %54, %62 : vector<4x256xi1>, vector<4x256xf32>
    %c0_35 = arith.constant 0 : index
    %c0_36 = arith.constant 0 : index
    %64 = vector.load %arg8[%c0_35, %c0_36] : memref<72x256xf32, #tpu.memory_space<vmem>>, vector<4x256xf32>
    tpu.vector_store %arg8[%c0_35, %c0_36], %63 {strides = array<i32>} : memref<72x256xf32, #tpu.memory_space<vmem>>, vector<4x256xf32>,
    %c16_i32_37 = arith.constant 16 : i32
    %65 = tpu.dynamic_rotate %53 by %c16_i32_37 dim 1 : vector<4x256xf32>, i32 -> vector<4x256xf32>
    %c16_i32_38 = arith.constant 16 : i32
    %66 = vector.broadcast %c16_i32_38 : i32 to vector<1x256xi32>
    %67 = arith.cmpi sge, %10, %66 : vector<1x256xi32>
    %cst_39 = arith.constant 0.000000e+00 : f32
    %68 = vector.shape_cast %67 : vector<1x256xi1> to vector<1x256xi1>
    %69 = vector.broadcast %68 : vector<1x256xi1> to vector<4x256xi1>
    %70 = vector.broadcast %cst_39 : f32 to vector<4x256xf32>
    %71 = arith.select %69, %65, %70 : vector<4x256xi1>, vector<4x256xf32>
    %c8 = arith.constant 8 : index
    %c0_40 = arith.constant 0 : index
    %72 = vector.load %arg8[%c8, %c0_40] : memref<72x256xf32, #tpu.memory_space<vmem>>, vector<4x256xf32>
    tpu.vector_store %arg8[%c8, %c0_40], %71 {strides = array<i32>} : memref<72x256xf32, #tpu.memory_space<vmem>>, vector<4x256xf32>,
    %c15_i32 = arith.constant 15 : i32
    %73 = tpu.dynamic_rotate %53 by %c15_i32 dim 1 : vector<4x256xf32>, i32 -> vector<4x256xf32>
    %c16_i32_41 = arith.constant 16 : i32
    %74 = vector.broadcast %c16_i32_41 : i32 to vector<1x256xi32>
    %75 = arith.cmpi sge, %10, %74 : vector<1x256xi32>
    %c15_i32_42 = arith.constant 15 : i32
    %76 = vector.broadcast %c15_i32_42 : i32 to vector<1x256xi32>
    %77 = arith.cmpi slt, %11, %76 : vector<1x256xi32>
    %78 = arith.andi %75, %77 : vector<1x256xi1>
    %cst_43 = arith.constant 0.000000e+00 : f32
    %79 = vector.shape_cast %78 : vector<1x256xi1> to vector<1x256xi1>
    %80 = vector.broadcast %79 : vector<1x256xi1> to vector<4x256xi1>
    %81 = vector.broadcast %cst_43 : f32 to vector<4x256xf32>
    %82 = arith.select %80, %73, %81 : vector<4x256xi1>, vector<4x256xf32>
    %c16 = arith.constant 16 : index
    %c0_44 = arith.constant 0 : index
    %83 = vector.load %arg8[%c16, %c0_44] : memref<72x256xf32, #tpu.memory_space<vmem>>, vector<4x256xf32>
    tpu.vector_store %arg8[%c16, %c0_44], %82 {strides = array<i32>} : memref<72x256xf32, #tpu.memory_space<vmem>>, vector<4x256xf32>,
    %c1_i32_45 = arith.constant 1 : i32
    %84 = tpu.dynamic_rotate %53 by %c1_i32_45 dim 1 : vector<4x256xf32>, i32 -> vector<4x256xf32>
    %c1_i32_46 = arith.constant 1 : i32
    %85 = vector.broadcast %c1_i32_46 : i32 to vector<1x256xi32>
    %86 = arith.cmpi sge, %11, %85 : vector<1x256xi32>
    %cst_47 = arith.constant 0.000000e+00 : f32
    %87 = vector.shape_cast %86 : vector<1x256xi1> to vector<1x256xi1>
    %88 = vector.broadcast %87 : vector<1x256xi1> to vector<4x256xi1>
    %89 = vector.broadcast %cst_47 : f32 to vector<4x256xf32>
    %90 = arith.select %88, %84, %89 : vector<4x256xi1>, vector<4x256xf32>
    %c24 = arith.constant 24 : index
    %c0_48 = arith.constant 0 : index
    %91 = vector.load %arg8[%c24, %c0_48] : memref<72x256xf32, #tpu.memory_space<vmem>>, vector<4x256xf32>
    tpu.vector_store %arg8[%c24, %c0_48], %90 {strides = array<i32>} : memref<72x256xf32, #tpu.memory_space<vmem>>, vector<4x256xf32>,
    %c32 = arith.constant 32 : index
    %c0_49 = arith.constant 0 : index
    %92 = vector.load %arg8[%c32, %c0_49] : memref<72x256xf32, #tpu.memory_space<vmem>>, vector<4x256xf32>
    tpu.vector_store %arg8[%c32, %c0_49], %53 {strides = array<i32>} : memref<72x256xf32, #tpu.memory_space<vmem>>, vector<4x256xf32>,
    %c255_i32 = arith.constant 255 : i32
    %93 = tpu.dynamic_rotate %53 by %c255_i32 dim 1 : vector<4x256xf32>, i32 -> vector<4x256xf32>
    %c15_i32_50 = arith.constant 15 : i32
    %94 = vector.broadcast %c15_i32_50 : i32 to vector<1x256xi32>
    %95 = arith.cmpi slt, %11, %94 : vector<1x256xi32>
    %cst_51 = arith.constant 0.000000e+00 : f32
    %96 = vector.shape_cast %95 : vector<1x256xi1> to vector<1x256xi1>
    %97 = vector.broadcast %96 : vector<1x256xi1> to vector<4x256xi1>
    %98 = vector.broadcast %cst_51 : f32 to vector<4x256xf32>
    %99 = arith.select %97, %93, %98 : vector<4x256xi1>, vector<4x256xf32>
    %c40 = arith.constant 40 : index
    %c0_52 = arith.constant 0 : index
    %100 = vector.load %arg8[%c40, %c0_52] : memref<72x256xf32, #tpu.memory_space<vmem>>, vector<4x256xf32>
    tpu.vector_store %arg8[%c40, %c0_52], %99 {strides = array<i32>} : memref<72x256xf32, #tpu.memory_space<vmem>>, vector<4x256xf32>,
    %c241_i32 = arith.constant 241 : i32
    %101 = tpu.dynamic_rotate %53 by %c241_i32 dim 1 : vector<4x256xf32>, i32 -> vector<4x256xf32>
    %c240_i32 = arith.constant 240 : i32
    %102 = vector.broadcast %c240_i32 : i32 to vector<1x256xi32>
    %103 = arith.cmpi slt, %10, %102 : vector<1x256xi32>
    %c1_i32_53 = arith.constant 1 : i32
    %104 = vector.broadcast %c1_i32_53 : i32 to vector<1x256xi32>
    %105 = arith.cmpi sge, %11, %104 : vector<1x256xi32>
    %106 = arith.andi %103, %105 : vector<1x256xi1>
    %cst_54 = arith.constant 0.000000e+00 : f32
    %107 = vector.shape_cast %106 : vector<1x256xi1> to vector<1x256xi1>
    %108 = vector.broadcast %107 : vector<1x256xi1> to vector<4x256xi1>
    %109 = vector.broadcast %cst_54 : f32 to vector<4x256xf32>
    %110 = arith.select %108, %101, %109 : vector<4x256xi1>, vector<4x256xf32>
    %c48 = arith.constant 48 : index
    %c0_55 = arith.constant 0 : index
    %111 = vector.load %arg8[%c48, %c0_55] : memref<72x256xf32, #tpu.memory_space<vmem>>, vector<4x256xf32>
    tpu.vector_store %arg8[%c48, %c0_55], %110 {strides = array<i32>} : memref<72x256xf32, #tpu.memory_space<vmem>>, vector<4x256xf32>,
    %c240_i32_56 = arith.constant 240 : i32
    %112 = tpu.dynamic_rotate %53 by %c240_i32_56 dim 1 : vector<4x256xf32>, i32 -> vector<4x256xf32>
    %c240_i32_57 = arith.constant 240 : i32
    %113 = vector.broadcast %c240_i32_57 : i32 to vector<1x256xi32>
    %114 = arith.cmpi slt, %10, %113 : vector<1x256xi32>
    %cst_58 = arith.constant 0.000000e+00 : f32
    %115 = vector.shape_cast %114 : vector<1x256xi1> to vector<1x256xi1>
    %116 = vector.broadcast %115 : vector<1x256xi1> to vector<4x256xi1>
    %117 = vector.broadcast %cst_58 : f32 to vector<4x256xf32>
    %118 = arith.select %116, %112, %117 : vector<4x256xi1>, vector<4x256xf32>
    %c56 = arith.constant 56 : index
    %c0_59 = arith.constant 0 : index
    %119 = vector.load %arg8[%c56, %c0_59] : memref<72x256xf32, #tpu.memory_space<vmem>>, vector<4x256xf32>
    tpu.vector_store %arg8[%c56, %c0_59], %118 {strides = array<i32>} : memref<72x256xf32, #tpu.memory_space<vmem>>, vector<4x256xf32>,
    %c239_i32 = arith.constant 239 : i32
    %120 = tpu.dynamic_rotate %53 by %c239_i32 dim 1 : vector<4x256xf32>, i32 -> vector<4x256xf32>
    %c240_i32_60 = arith.constant 240 : i32
    %121 = vector.broadcast %c240_i32_60 : i32 to vector<1x256xi32>
    %122 = arith.cmpi slt, %10, %121 : vector<1x256xi32>
    %c15_i32_61 = arith.constant 15 : i32
    %123 = vector.broadcast %c15_i32_61 : i32 to vector<1x256xi32>
    %124 = arith.cmpi slt, %11, %123 : vector<1x256xi32>
    %125 = arith.andi %122, %124 : vector<1x256xi1>
    %cst_62 = arith.constant 0.000000e+00 : f32
    %126 = vector.shape_cast %125 : vector<1x256xi1> to vector<1x256xi1>
    %127 = vector.broadcast %126 : vector<1x256xi1> to vector<4x256xi1>
    %128 = vector.broadcast %cst_62 : f32 to vector<4x256xf32>
    %129 = arith.select %127, %120, %128 : vector<4x256xi1>, vector<4x256xf32>
    %c64 = arith.constant 64 : index
    %c0_63 = arith.constant 0 : index
    %130 = vector.load %arg8[%c64, %c0_63] : memref<72x256xf32, #tpu.memory_space<vmem>>, vector<4x256xf32>
    tpu.vector_store %arg8[%c64, %c0_63], %129 {strides = array<i32>} : memref<72x256xf32, #tpu.memory_space<vmem>>, vector<4x256xf32>,
    %c0_64 = arith.constant 0 : index
    %c0_65 = arith.constant 0 : index
    %131 = vector.load %arg3[%c0_64, %c0_65] : memref<4x72xf32, #tpu.memory_space<vmem>>, vector<4x72xf32>
    %c0_66 = arith.constant 0 : index
    %c0_67 = arith.constant 0 : index
    %132 = vector.load %arg8[%c0_66, %c0_67] : memref<72x256xf32, #tpu.memory_space<vmem>>, vector<72x256xf32>
    %cst_68 = arith.constant dense<0.000000e+00> : vector<4x256xf32>
    %133 = tpu.matmul %131, %132, %cst_68 {dimension_numbers = #tpu.dot_dimension_numbers<[1], [0], [0], [1], [0, 0, 1, 1], [], []>} : vector<4x72xf32>, vector<72x256xf32>, vector<4x256xf32> -> vector<4x256xf32>
    %cst_69 = arith.constant dense<0.000000e+00> : vector<4xf32>
    %134 = vector.multi_reduction <add>, %133, %cst_69 [1] : vector<4x256xf32> to vector<4xf32>
    %135 = vector.shape_cast %134 : vector<4xf32> to vector<4x1xf32>
    %cst_70 = arith.constant 3.906250e-03 : f32
    %136 = vector.broadcast %cst_70 : f32 to vector<4x1xf32>
    %137 = arith.mulf %135, %136 : vector<4x1xf32>
    %138 = vector.broadcast %137 : vector<4x1xf32> to vector<4x256xf32>
    %139 = arith.subf %133, %138 : vector<4x256xf32>
    %140 = arith.mulf %139, %139 : vector<4x256xf32>
    %cst_71 = arith.constant dense<0.000000e+00> : vector<4xf32>
    %141 = vector.multi_reduction <add>, %140, %cst_71 [1] : vector<4x256xf32> to vector<4xf32>
    %142 = vector.shape_cast %141 : vector<4xf32> to vector<4x1xf32>
    %cst_72 = arith.constant 3.906250e-03 : f32
    %143 = vector.broadcast %cst_72 : f32 to vector<4x1xf32>
    %144 = arith.mulf %142, %143 : vector<4x1xf32>
    %cst_73 = arith.constant 9.99999974E-6 : f32
    %145 = vector.broadcast %cst_73 : f32 to vector<4x1xf32>
    %146 = arith.addf %144, %145 : vector<4x1xf32>
    %147 = math.rsqrt %146 : vector<4x1xf32>
    %148 = vector.broadcast %147 : vector<4x1xf32> to vector<4x256xf32>
    %149 = arith.mulf %139, %148 : vector<4x256xf32>
    %150 = vector.broadcast %34 : vector<4x1xf32> to vector<4x256xf32>
    %151 = arith.mulf %149, %150 : vector<4x256xf32>
    %152 = vector.broadcast %35 : vector<4x1xf32> to vector<4x256xf32>
    %153 = arith.addf %151, %152 : vector<4x256xf32>
    %cst_74 = arith.constant 0.000000e+00 : f32
    %154 = vector.broadcast %cst_74 : f32 to vector<4x256xf32>
    %155 = arith.maximumf %153, %154 : vector<4x256xf32>
    %c34_i32 = arith.constant 34 : i32
    %156 = tpu.dynamic_rotate %155 by %c34_i32 dim 1 : vector<4x256xf32>, i32 -> vector<4x256xf32>
    %c32_i32 = arith.constant 32 : i32
    %157 = vector.broadcast %c32_i32 : i32 to vector<1x256xi32>
    %158 = arith.cmpi sge, %10, %157 : vector<1x256xi32>
    %c2_i32 = arith.constant 2 : i32
    %159 = vector.broadcast %c2_i32 : i32 to vector<1x256xi32>
    %160 = arith.cmpi sge, %11, %159 : vector<1x256xi32>
    %161 = arith.andi %158, %160 : vector<1x256xi1>
    %cst_75 = arith.constant 0.000000e+00 : f32
    %162 = vector.shape_cast %161 : vector<1x256xi1> to vector<1x256xi1>
    %163 = vector.broadcast %162 : vector<1x256xi1> to vector<4x256xi1>
    %164 = vector.broadcast %cst_75 : f32 to vector<4x256xf32>
    %165 = arith.select %163, %156, %164 : vector<4x256xi1>, vector<4x256xf32>
    %c0_76 = arith.constant 0 : index
    %c0_77 = arith.constant 0 : index
    %166 = vector.load %arg8[%c0_76, %c0_77] : memref<72x256xf32, #tpu.memory_space<vmem>>, vector<4x256xf32>
    tpu.vector_store %arg8[%c0_76, %c0_77], %165 {strides = array<i32>} : memref<72x256xf32, #tpu.memory_space<vmem>>, vector<4x256xf32>,
    %c32_i32_78 = arith.constant 32 : i32
    %167 = tpu.dynamic_rotate %155 by %c32_i32_78 dim 1 : vector<4x256xf32>, i32 -> vector<4x256xf32>
    %c32_i32_79 = arith.constant 32 : i32
    %168 = vector.broadcast %c32_i32_79 : i32 to vector<1x256xi32>
    %169 = arith.cmpi sge, %10, %168 : vector<1x256xi32>
    %cst_80 = arith.constant 0.000000e+00 : f32
    %170 = vector.shape_cast %169 : vector<1x256xi1> to vector<1x256xi1>
    %171 = vector.broadcast %170 : vector<1x256xi1> to vector<4x256xi1>
    %172 = vector.broadcast %cst_80 : f32 to vector<4x256xf32>
    %173 = arith.select %171, %167, %172 : vector<4x256xi1>, vector<4x256xf32>
    %c8_81 = arith.constant 8 : index
    %c0_82 = arith.constant 0 : index
    %174 = vector.load %arg8[%c8_81, %c0_82] : memref<72x256xf32, #tpu.memory_space<vmem>>, vector<4x256xf32>
    tpu.vector_store %arg8[%c8_81, %c0_82], %173 {strides = array<i32>} : memref<72x256xf32, #tpu.memory_space<vmem>>, vector<4x256xf32>,
    %c30_i32 = arith.constant 30 : i32
    %175 = tpu.dynamic_rotate %155 by %c30_i32 dim 1 : vector<4x256xf32>, i32 -> vector<4x256xf32>
    %c32_i32_83 = arith.constant 32 : i32
    %176 = vector.broadcast %c32_i32_83 : i32 to vector<1x256xi32>
    %177 = arith.cmpi sge, %10, %176 : vector<1x256xi32>
    %c14_i32 = arith.constant 14 : i32
    %178 = vector.broadcast %c14_i32 : i32 to vector<1x256xi32>
    %179 = arith.cmpi slt, %11, %178 : vector<1x256xi32>
    %180 = arith.andi %177, %179 : vector<1x256xi1>
    %cst_84 = arith.constant 0.000000e+00 : f32
    %181 = vector.shape_cast %180 : vector<1x256xi1> to vector<1x256xi1>
    %182 = vector.broadcast %181 : vector<1x256xi1> to vector<4x256xi1>
    %183 = vector.broadcast %cst_84 : f32 to vector<4x256xf32>
    %184 = arith.select %182, %175, %183 : vector<4x256xi1>, vector<4x256xf32>
    %c16_85 = arith.constant 16 : index
    %c0_86 = arith.constant 0 : index
    %185 = vector.load %arg8[%c16_85, %c0_86] : memref<72x256xf32, #tpu.memory_space<vmem>>, vector<4x256xf32>
    tpu.vector_store %arg8[%c16_85, %c0_86], %184 {strides = array<i32>} : memref<72x256xf32, #tpu.memory_space<vmem>>, vector<4x256xf32>,
    %c2_i32_87 = arith.constant 2 : i32
    %186 = tpu.dynamic_rotate %155 by %c2_i32_87 dim 1 : vector<4x256xf32>, i32 -> vector<4x256xf32>
    %c2_i32_88 = arith.constant 2 : i32
    %187 = vector.broadcast %c2_i32_88 : i32 to vector<1x256xi32>
    %188 = arith.cmpi sge, %11, %187 : vector<1x256xi32>
    %cst_89 = arith.constant 0.000000e+00 : f32
    %189 = vector.shape_cast %188 : vector<1x256xi1> to vector<1x256xi1>
    %190 = vector.broadcast %189 : vector<1x256xi1> to vector<4x256xi1>
    %191 = vector.broadcast %cst_89 : f32 to vector<4x256xf32>
    %192 = arith.select %190, %186, %191 : vector<4x256xi1>, vector<4x256xf32>
    %c24_90 = arith.constant 24 : index
    %c0_91 = arith.constant 0 : index
    %193 = vector.load %arg8[%c24_90, %c0_91] : memref<72x256xf32, #tpu.memory_space<vmem>>, vector<4x256xf32>
    tpu.vector_store %arg8[%c24_90, %c0_91], %192 {strides = array<i32>} : memref<72x256xf32, #tpu.memory_space<vmem>>, vector<4x256xf32>,
    %c32_92 = arith.constant 32 : index
    %c0_93 = arith.constant 0 : index
    %194 = vector.load %arg8[%c32_92, %c0_93] : memref<72x256xf32, #tpu.memory_space<vmem>>, vector<4x256xf32>
    tpu.vector_store %arg8[%c32_92, %c0_93], %155 {strides = array<i32>} : memref<72x256xf32, #tpu.memory_space<vmem>>, vector<4x256xf32>,
    %c254_i32 = arith.constant 254 : i32
    %195 = tpu.dynamic_rotate %155 by %c254_i32 dim 1 : vector<4x256xf32>, i32 -> vector<4x256xf32>
    %c14_i32_94 = arith.constant 14 : i32
    %196 = vector.broadcast %c14_i32_94 : i32 to vector<1x256xi32>
    %197 = arith.cmpi slt, %11, %196 : vector<1x256xi32>
    %cst_95 = arith.constant 0.000000e+00 : f32
    %198 = vector.shape_cast %197 : vector<1x256xi1> to vector<1x256xi1>
    %199 = vector.broadcast %198 : vector<1x256xi1> to vector<4x256xi1>
    %200 = vector.broadcast %cst_95 : f32 to vector<4x256xf32>
    %201 = arith.select %199, %195, %200 : vector<4x256xi1>, vector<4x256xf32>
    %c40_96 = arith.constant 40 : index
    %c0_97 = arith.constant 0 : index
    %202 = vector.load %arg8[%c40_96, %c0_97] : memref<72x256xf32, #tpu.memory_space<vmem>>, vector<4x256xf32>
    tpu.vector_store %arg8[%c40_96, %c0_97], %201 {strides = array<i32>} : memref<72x256xf32, #tpu.memory_space<vmem>>, vector<4x256xf32>,
    %c226_i32 = arith.constant 226 : i32
    %203 = tpu.dynamic_rotate %155 by %c226_i32 dim 1 : vector<4x256xf32>, i32 -> vector<4x256xf32>
    %c224_i32 = arith.constant 224 : i32
    %204 = vector.broadcast %c224_i32 : i32 to vector<1x256xi32>
    %205 = arith.cmpi slt, %10, %204 : vector<1x256xi32>
    %c2_i32_98 = arith.constant 2 : i32
    %206 = vector.broadcast %c2_i32_98 : i32 to vector<1x256xi32>
    %207 = arith.cmpi sge, %11, %206 : vector<1x256xi32>
    %208 = arith.andi %205, %207 : vector<1x256xi1>
    %cst_99 = arith.constant 0.000000e+00 : f32
    %209 = vector.shape_cast %208 : vector<1x256xi1> to vector<1x256xi1>
    %210 = vector.broadcast %209 : vector<1x256xi1> to vector<4x256xi1>
    %211 = vector.broadcast %cst_99 : f32 to vector<4x256xf32>
    %212 = arith.select %210, %203, %211 : vector<4x256xi1>, vector<4x256xf32>
    %c48_100 = arith.constant 48 : index
    %c0_101 = arith.constant 0 : index
    %213 = vector.load %arg8[%c48_100, %c0_101] : memref<72x256xf32, #tpu.memory_space<vmem>>, vector<4x256xf32>
    tpu.vector_store %arg8[%c48_100, %c0_101], %212 {strides = array<i32>} : memref<72x256xf32, #tpu.memory_space<vmem>>, vector<4x256xf32>,
    %c224_i32_102 = arith.constant 224 : i32
    %214 = tpu.dynamic_rotate %155 by %c224_i32_102 dim 1 : vector<4x256xf32>, i32 -> vector<4x256xf32>
    %c224_i32_103 = arith.constant 224 : i32
    %215 = vector.broadcast %c224_i32_103 : i32 to vector<1x256xi32>
    %216 = arith.cmpi slt, %10, %215 : vector<1x256xi32>
    %cst_104 = arith.constant 0.000000e+00 : f32
    %217 = vector.shape_cast %216 : vector<1x256xi1> to vector<1x256xi1>
    %218 = vector.broadcast %217 : vector<1x256xi1> to vector<4x256xi1>
    %219 = vector.broadcast %cst_104 : f32 to vector<4x256xf32>
    %220 = arith.select %218, %214, %219 : vector<4x256xi1>, vector<4x256xf32>
    %c56_105 = arith.constant 56 : index
    %c0_106 = arith.constant 0 : index
    %221 = vector.load %arg8[%c56_105, %c0_106] : memref<72x256xf32, #tpu.memory_space<vmem>>, vector<4x256xf32>
    tpu.vector_store %arg8[%c56_105, %c0_106], %220 {strides = array<i32>} : memref<72x256xf32, #tpu.memory_space<vmem>>, vector<4x256xf32>,
    %c222_i32 = arith.constant 222 : i32
    %222 = tpu.dynamic_rotate %155 by %c222_i32 dim 1 : vector<4x256xf32>, i32 -> vector<4x256xf32>
    %c224_i32_107 = arith.constant 224 : i32
    %223 = vector.broadcast %c224_i32_107 : i32 to vector<1x256xi32>
    %224 = arith.cmpi slt, %10, %223 : vector<1x256xi32>
    %c14_i32_108 = arith.constant 14 : i32
    %225 = vector.broadcast %c14_i32_108 : i32 to vector<1x256xi32>
    %226 = arith.cmpi slt, %11, %225 : vector<1x256xi32>
    %227 = arith.andi %224, %226 : vector<1x256xi1>
    %cst_109 = arith.constant 0.000000e+00 : f32
    %228 = vector.shape_cast %227 : vector<1x256xi1> to vector<1x256xi1>
    %229 = vector.broadcast %228 : vector<1x256xi1> to vector<4x256xi1>
    %230 = vector.broadcast %cst_109 : f32 to vector<4x256xf32>
    %231 = arith.select %229, %222, %230 : vector<4x256xi1>, vector<4x256xf32>
    %c64_110 = arith.constant 64 : index
    %c0_111 = arith.constant 0 : index
    %232 = vector.load %arg8[%c64_110, %c0_111] : memref<72x256xf32, #tpu.memory_space<vmem>>, vector<4x256xf32>
    tpu.vector_store %arg8[%c64_110, %c0_111], %231 {strides = array<i32>} : memref<72x256xf32, #tpu.memory_space<vmem>>, vector<4x256xf32>,
    %c0_112 = arith.constant 0 : index
    %c0_113 = arith.constant 0 : index
    %233 = vector.load %arg4[%c0_112, %c0_113] : memref<4x72xf32, #tpu.memory_space<vmem>>, vector<4x72xf32>
    %c0_114 = arith.constant 0 : index
    %c0_115 = arith.constant 0 : index
    %234 = vector.load %arg8[%c0_114, %c0_115] : memref<72x256xf32, #tpu.memory_space<vmem>>, vector<72x256xf32>
    %cst_116 = arith.constant dense<0.000000e+00> : vector<4x256xf32>
    %235 = tpu.matmul %233, %234, %cst_116 {dimension_numbers = #tpu.dot_dimension_numbers<[1], [0], [0], [1], [0, 0, 1, 1], [], []>} : vector<4x72xf32>, vector<72x256xf32>, vector<4x256xf32> -> vector<4x256xf32>
    %c0_117 = arith.constant 0 : index
    %c0_118 = arith.constant 0 : index
    %c0_119 = arith.constant 0 : index
    %236 = vector.load %arg7[%c0_117, %c0_118, %c0_119] : memref<1x4x256xf32, #tpu.memory_space<vmem>>, vector<1x4x256xf32>
    %237 = vector.shape_cast %236 : vector<1x4x256xf32> to vector<4x256xf32>
    %238 = arith.addf %237, %235 : vector<4x256xf32>
    %c0_120 = arith.constant 0 : index
    %c0_121 = arith.constant 0 : index
    %c0_122 = arith.constant 0 : index
    %239 = vector.load %arg7[%c0_120, %c0_121, %c0_122] : memref<1x4x256xf32, #tpu.memory_space<vmem>>, vector<1x4x256xf32>
    %240 = vector.shape_cast %239 : vector<1x4x256xf32> to vector<4x256xf32>
    %241 = vector.shape_cast %238 : vector<4x256xf32> to vector<1x4x256xf32>
    tpu.vector_store %arg7[%c0_120, %c0_121, %c0_122], %241 {strides = array<i32>} : memref<1x4x256xf32, #tpu.memory_space<vmem>>, vector<1x4x256xf32>,
    return
  }
  func.func @transform_0(%arg0: i32) -> (i32, i32, i32) {
    %c0_i32 = arith.constant 0 : i32
    %c0_i32_0 = arith.constant 0 : i32
    %c0_i32_1 = arith.constant 0 : i32
    return %arg0, %c0_i32, %c0_i32_0 : i32, i32, i32
  }
  func.func @transform_1(%arg0: i32) -> (i32, i32) {
    %c0_i32 = arith.constant 0 : i32
    %c0_i32_0 = arith.constant 0 : i32
    %c0_i32_1 = arith.constant 0 : i32
    return %c0_i32, %c0_i32_0 : i32, i32
  }
  func.func @transform_2(%arg0: i32) -> (i32, i32) {
    %c0_i32 = arith.constant 0 : i32
    %c0_i32_0 = arith.constant 0 : i32
    %c0_i32_1 = arith.constant 0 : i32
    return %c0_i32, %c0_i32_0 : i32, i32
  }
  func.func @transform_3(%arg0: i32) -> (i32, i32) {
    %c0_i32 = arith.constant 0 : i32
    %c0_i32_0 = arith.constant 0 : i32
    %c0_i32_1 = arith.constant 0 : i32
    return %c0_i32, %c0_i32_0 : i32, i32
  }
  func.func @transform_4(%arg0: i32) -> (i32, i32) {
    %c0_i32 = arith.constant 0 : i32
    %c0_i32_0 = arith.constant 0 : i32
    %c0_i32_1 = arith.constant 0 : i32
    return %c0_i32, %c0_i32_0 : i32, i32
  }
  func.func @transform_5(%arg0: i32) -> (i32, i32) {
    %c0_i32 = arith.constant 0 : i32
    %c0_i32_0 = arith.constant 0 : i32
    %c0_i32_1 = arith.constant 0 : i32
    return %c0_i32, %c0_i32_0 : i32, i32
  }
  func.func @transform_6(%arg0: i32) -> (i32, i32, i32) {
    %c0_i32 = arith.constant 0 : i32
    %c0_i32_0 = arith.constant 0 : i32
    %c0_i32_1 = arith.constant 0 : i32
    return %arg0, %c0_i32, %c0_i32_0 : i32, i32, i32
  }
}

</mosaic_0001>

<llo_original>
// kernel: tpu_custom_call.1
$region0: #{tpu_custom_call.1}
  #allocation0 [shape = 'u32[]', space=smem, size = 0x4, offset = 0x4, fixed_abs, tag = 'smem constant byte address 0x4 - core index']
  #allocation1 [shape = 'u32[72,128]{1,0:T(1,128)}', space=vmem, size = 0x9000, scoped, tag = 'internal scratch']
  #allocation2 [shape = 'f32[72,256]{1,0:T(8,128)}', space=vmem, size = 0x12000, scoped, tag = 'scratch operand']
  %s0 = inlined_call_operand.hbm [shape: f32[2,4,256], index: 0, kind: input, shape index: {}]
  %s1 = inlined_call_operand.hbm [shape: f32[4,4], index: 1, kind: input, shape index: {}]
  %s2 = inlined_call_operand.hbm [shape: f32[4,72], index: 2, kind: input, shape index: {}]
  %s3 = inlined_call_operand.hbm [shape: f32[4,72], index: 3, kind: input, shape index: {}]
  %s4 = inlined_call_operand.hbm [shape: f32[4,6], index: 4, kind: input, shape index: {}]
  %s5 = inlined_call_operand.vmem [shape: s32[1,256], index: 5, kind: input, shape index: {}]
  %s6 = inlined_call_operand.hbm [shape: f32[2,4,256], index: 6, kind: output, shape index: {}]
  %s7 = sld [smem:[#allocation0]]
  $region77: #{tpu_custom_call.1} parent=0
    _
  %s9 = ssub.s32 1, %s7
  %s10 = scalar_select 0, %s9, %s7
  $region1: #{tpu_custom_call.1} parent=0
    #allocation3 [shape = 'u8[8192]{0}', space=vmem, size = 0x2000, scoped, tag = 'input window, operand 0']
    #allocation4 [shape = 's32[2]{0}', space=sflag, size = 0x8, scoped, tag = 'scoped memory for tpu_custom_call.1']
    #allocation5 [shape = 's32[2]{0}', space=sflag, size = 0x8, scoped, tag = 'scoped memory for tpu_custom_call.1']
    #allocation6 [shape = 'u8[2048]{0}', space=vmem, size = 0x800, scoped, tag = 'input window, operand 1, single buffered']
    #allocation7 [shape = 's32[1]{0}', space=sflag, size = 0x4, scoped, tag = 'scoped memory for tpu_custom_call.1']
    #allocation8 [shape = 'u8[2048]{0}', space=vmem, size = 0x800, scoped, tag = 'input window, operand 2, single buffered']
    #allocation9 [shape = 'u8[2048]{0}', space=vmem, size = 0x800, scoped, tag = 'input window, operand 3, single buffered']
    #allocation10 [shape = 's32[1]{0}', space=sflag, size = 0x4, scoped, tag = 'scoped memory for tpu_custom_call.1']
    #allocation11 [shape = 'u8[2048]{0}', space=vmem, size = 0x800, scoped, tag = 'input window, operand 4, single buffered']
    #allocation12 [shape = 'u8[8192]{0}', space=vmem, size = 0x2000, scoped, tag = 'output window, operand 0']
    %11 = vsyncpa [#allocation4], 0
    %s12 = scalar_lea.sflag [#allocation4], 1
    %13 = vsyncpa %s12, 0
    %14 = vsyncpa [#allocation7], 0
    %15 = vsyncpa [#allocation10], 0
    %16 = vsyncpa [#allocation5], 0
    %s17 = scalar_lea.sflag [#allocation5], 1
    %18 = vsyncpa %s17, 0
    loop: start=0, step=1, limit=4
    $region2: #{tpu_custom_call.1} parent=1 // loop_pre_header
      _
    $region3: #{tpu_custom_call.1} parent=1 // loop_header
      %s20 = sphi 0, %s24
      %p21 = scmp.ge.s32.totalorder %s20, 4
      %s30 = sphi 0, %s32
      %s33 = sphi 0, %s30
      %s34 = sphi 0, %s33
      %s50 = sphi 0, %s34
      %s54 = sphi 0, %s54
      %s56 = sphi 0, %s54
      %s57 = sphi 0, %s56
      %s71 = sphi 0, %s57
      %s75 = sphi 0, %s75
      %s77 = sphi 0, %s75
      %s78 = sphi 0, %s77
      %s92 = sphi 0, %s78
      %s96 = sphi 0, %s96
      %s98 = sphi 0, %s96
      %s99 = sphi 0, %s98
      %s113 = sphi 0, %s99
      %s117 = sphi 0, %s117
      %s119 = sphi 0, %s117
      %s120 = sphi 0, %s119
      %s134 = sphi 0, %s120
      %s138 = sphi 0, %s138
      %s140 = sphi 0, %s138
      %s141 = sphi 0, %s140
      %s155 = sphi 0, %s141
      %s161 = sphi 0, %s163
      %s164 = sphi 0, %s161
      %s165 = sphi 0, %s164
      %s181 = sphi 0, %s165
    $region4: #{tpu_custom_call.1} parent=1 // loop_header_branch
      %23 = sbr.rel (%p21) target = $region8
    $region5: #{tpu_custom_call.1} parent=1 // loop_body
      %s25 = ssub.s32 %s20, 1
      %s26 = ssub.s32 %s20, 2
      %s27 = sadd.s32 %s20, 1
      %s28 = ssub.s32 %s20, %s27
      %p29 = scmp.eq.s32.totalorder %s28, 0
      %s31 = sadd.s32 %s30, 1
      %s32 = scalar_select %p29, %s30, %s31
      %p35 = pneg %p29
      %p36 = scmp.eq.s32.totalorder %s20, 1
      %p37 = por %p35, %p36
      %p38 = scmp.ne.s32.totalorder %s30, %s33
      %p39 = scmp.eq.s32.totalorder %s20, 0
      %p40 = por %p38, %p39
      %p41 = scmp.ne.s32.totalorder %s30, %s33
      %p42 = scmp.eq.s32.totalorder %s25, 1
      %p43 = por %p41, %p42
      %p44 = scmp.ne.s32.totalorder %s33, %s34
      %p45 = scmp.eq.s32.totalorder %s25, 0
      %p46 = por %p44, %p45
      %p47 = scmp.ne.s32.totalorder %s33, %s34
      %p48 = scmp.eq.s32.totalorder %s26, 1
      %p49 = por %p47, %p48
      %p51 = scmp.ne.s32.totalorder %s34, %s50
      %p52 = scmp.eq.s32.totalorder %s26, 0
      %p53 = por %p51, %p52
      %s55 = sadd.s32 %s54, 1
      %p58 = scmp.eq.s32.totalorder %s20, 1
      %p59 = scmp.ne.s32.totalorder %s54, %s56
      %p60 = scmp.eq.s32.totalorder %s20, 0
      %p61 = por %p59, %p60
      %p62 = scmp.ne.s32.totalorder %s54, %s56
      %p63 = scmp.eq.s32.totalorder %s25, 1
      %p64 = por %p62, %p63
      %p65 = scmp.ne.s32.totalorder %s56, %s57
      %p66 = scmp.eq.s32.totalorder %s25, 0
      %p67 = por %p65, %p66
      %p68 = scmp.ne.s32.totalorder %s56, %s57
      %p69 = scmp.eq.s32.totalorder %s26, 1
      %p70 = por %p68, %p69
      %p72 = scmp.ne.s32.totalorder %s57, %s71
      %p73 = scmp.eq.s32.totalorder %s26, 0
      %p74 = por %p72, %p73
      %s76 = sadd.s32 %s75, 1
      %p79 = scmp.eq.s32.totalorder %s20, 1
      %p80 = scmp.ne.s32.totalorder %s75, %s77
      %p81 = scmp.eq.s32.totalorder %s20, 0
      %p82 = por %p80, %p81
      %p83 = scmp.ne.s32.totalorder %s75, %s77
      %p84 = scmp.eq.s32.totalorder %s25, 1
      %p85 = por %p83, %p84
      %p86 = scmp.ne.s32.totalorder %s77, %s78
      %p87 = scmp.eq.s32.totalorder %s25, 0
      %p88 = por %p86, %p87
      %p89 = scmp.ne.s32.totalorder %s77, %s78
      %p90 = scmp.eq.s32.totalorder %s26, 1
      %p91 = por %p89, %p90
      %p93 = scmp.ne.s32.totalorder %s78, %s92
      %p94 = scmp.eq.s32.totalorder %s26, 0
      %p95 = por %p93, %p94
      %s97 = sadd.s32 %s96, 1
      %p100 = scmp.eq.s32.totalorder %s20, 1
      %p101 = scmp.ne.s32.totalorder %s96, %s98
      %p102 = scmp.eq.s32.totalorder %s20, 0
      %p103 = por %p101, %p102
      %p104 = scmp.ne.s32.totalorder %s96, %s98
      %p105 = scmp.eq.s32.totalorder %s25, 1
      %p106 = por %p104, %p105
      %p107 = scmp.ne.s32.totalorder %s98, %s99
      %p108 = scmp.eq.s32.totalorder %s25, 0
      %p109 = por %p107, %p108
      %p110 = scmp.ne.s32.totalorder %s98, %s99
      %p111 = scmp.eq.s32.totalorder %s26, 1
      %p112 = por %p110, %p111
      %p114 = scmp.ne.s32.totalorder %s99, %s113
      %p115 = scmp.eq.s32.totalorder %s26, 0
      %p116 = por %p114, %p115
      %s118 = sadd.s32 %s117, 1
      %p121 = scmp.eq.s32.totalorder %s20, 1
      %p122 = scmp.ne.s32.totalorder %s117, %s119
      %p123 = scmp.eq.s32.totalorder %s20, 0
      %p124 = por %p122, %p123
      %p125 = scmp.ne.s32.totalorder %s117, %s119
      %p126 = scmp.eq.s32.totalorder %s25, 1
      %p127 = por %p125, %p126
      %p128 = scmp.ne.s32.totalorder %s119, %s120
      %p129 = scmp.eq.s32.totalorder %s25, 0
      %p130 = por %p128, %p129
      %p131 = scmp.ne.s32.totalorder %s119, %s120
      %p132 = scmp.eq.s32.totalorder %s26, 1
      %p133 = por %p131, %p132
      %p135 = scmp.ne.s32.totalorder %s120, %s134
      %p136 = scmp.eq.s32.totalorder %s26, 0
      %p137 = por %p135, %p136
      %s139 = sadd.s32 %s138, 1
      %p142 = scmp.eq.s32.totalorder %s20, 1
      %p143 = scmp.ne.s32.totalorder %s138, %s140
      %p144 = scmp.eq.s32.totalorder %s20, 0
      %p145 = por %p143, %p144
      %p146 = scmp.ne.s32.totalorder %s138, %s140
      %p147 = scmp.eq.s32.totalorder %s25, 1
      %p148 = por %p146, %p147
      %p149 = scmp.ne.s32.totalorder %s140, %s141
      %p150 = scmp.eq.s32.totalorder %s25, 0
      %p151 = por %p149, %p150
      %p152 = scmp.ne.s32.totalorder %s140, %s141
      %p153 = scmp.eq.s32.totalorder %s26, 1
      %p154 = por %p152, %p153
      %p156 = scmp.ne.s32.totalorder %s141, %s155
      %p157 = scmp.eq.s32.totalorder %s26, 0
      %p158 = por %p156, %p157
      %s159 = ssub.s32 %s20, %s27
      %p160 = scmp.eq.s32.totalorder %s159, 0
      %s162 = sadd.s32 %s161, 1
      %s163 = scalar_select %p160, %s161, %s162
      %p166 = pneg %p160
      %p167 = scmp.eq.s32.totalorder %s20, 1
      %p168 = por %p166, %p167
      %p169 = scmp.ne.s32.totalorder %s161, %s164
      %p170 = scmp.eq.s32.totalorder %s20, 0
      %p171 = por %p169, %p170
      %p172 = scmp.ne.s32.totalorder %s161, %s164
      %p173 = scmp.eq.s32.totalorder %s25, 1
      %p174 = por %p172, %p173
      %p175 = scmp.ne.s32.totalorder %s164, %s165
      %p176 = scmp.eq.s32.totalorder %s25, 0
      %p177 = por %p175, %p176
      %p178 = scmp.ne.s32.totalorder %s164, %s165
      %p179 = scmp.eq.s32.totalorder %s26, 1
      %p180 = por %p178, %p179
      %p182 = scmp.ne.s32.totalorder %s165, %s181
      %p183 = scmp.eq.s32.totalorder %s26, 0
      %p184 = por %p182, %p183
      %p185 = scmp.le.s32.totalorder 1, %s20
      %p186 = scmp.lt.s32.totalorder %s20, 3
      %p187 = pnand %p185, %p186
      %p188 = pneg %p187
      // Predicated region
      $region9: #{tpu_custom_call.1} parent=5 // pred_check
        _
      $region10: #{tpu_custom_call.1} parent=5 // pred_check_branch
        %190 = sbr.rel (%p187) target = $region12
      $region11: #{tpu_custom_call.1} parent=5 // pred_region
        %s191 = ssub.s32 %s20, 1
        // Predicated region
        $region13: #{tpu_custom_call.1} parent=11 // pred_check
          %p192 = pneg %p67
        $region14: #{tpu_custom_call.1} parent=11 // pred_check_branch
          %194 = sbr.rel (%p192) target = $region16
        $region15: #{tpu_custom_call.1} parent=11 // pred_region
          %196 = vsyncadd [#allocation7], 0
          %s198 = sshll.u32 %s1, 4
          %s199 = int_to_ptr.hbm [resolvable:$true] %s198
          %s200 = sshll.u32 [#allocation6], 4
          %s201 = int_to_ptr.vmem [resolvable:$true] %s200
          %203 = dma.hbm_to_vmem [thread:$0]  %s199, 64, %s201, [#allocation7]
        $region16: #{tpu_custom_call.1} parent=11 // pred_fallthru
          _
        // Predicated region
        $region17: #{tpu_custom_call.1} parent=11 // pred_check
          %p204 = pneg %p88
        $region18: #{tpu_custom_call.1} parent=11 // pred_check_branch
          %206 = sbr.rel (%p204) target = $region20
        $region19: #{tpu_custom_call.1} parent=11 // pred_region
          %208 = vsyncadd [#allocation7], 0
          %s210 = sshll.u32 %s2, 4
          %s211 = int_to_ptr.hbm [resolvable:$true] %s210
          %s212 = sshll.u32 [#allocation8], 4
          %s213 = int_to_ptr.vmem [resolvable:$true] %s212
          %215 = dma.hbm_to_vmem [thread:$0]  %s211, 64, %s213, [#allocation7]
        $region20: #{tpu_custom_call.1} parent=11 // pred_fallthru
          _
        // Predicated region
        $region21: #{tpu_custom_call.1} parent=11 // pred_check
          %p216 = pneg %p109
        $region22: #{tpu_custom_call.1} parent=11 // pred_check_branch
          %218 = sbr.rel (%p216) target = $region24
        $region23: #{tpu_custom_call.1} parent=11 // pred_region
          %220 = vsyncadd [#allocation10], 0
          %s222 = sshll.u32 %s3, 4
          %s223 = int_to_ptr.hbm [resolvable:$true] %s222
          %s224 = sshll.u32 [#allocation9], 4
          %s225 = int_to_ptr.vmem [resolvable:$true] %s224
          %227 = dma.hbm_to_vmem [thread:$0]  %s223, 64, %s225, [#allocation10]
        $region24: #{tpu_custom_call.1} parent=11 // pred_fallthru
          _
        // Predicated region
        $region25: #{tpu_custom_call.1} parent=11 // pred_check
          %p228 = pneg %p130
        $region26: #{tpu_custom_call.1} parent=11 // pred_check_branch
          %230 = sbr.rel (%p228) target = $region28
        $region27: #{tpu_custom_call.1} parent=11 // pred_region
          %232 = vsyncadd [#allocation10], 0
          %s234 = sshll.u32 %s4, 4
          %s235 = int_to_ptr.hbm [resolvable:$true] %s234
          %s236 = sshll.u32 [#allocation11], 4
          %s237 = int_to_ptr.vmem [resolvable:$true] %s236
          %239 = dma.hbm_to_vmem [thread:$0]  %s235, 64, %s237, [#allocation10]
        $region28: #{tpu_custom_call.1} parent=11 // pred_fallthru
          _
        // Predicated region
        $region29: #{tpu_custom_call.1} parent=11 // pred_check
          %p240 = pneg %p151
        $region30: #{tpu_custom_call.1} parent=11 // pred_check_branch
          %242 = sbr.rel (%p240) target = $region32
        $region31: #{tpu_custom_call.1} parent=11 // pred_region
          _
        $region32: #{tpu_custom_call.1} parent=11 // pred_fallthru
          _
      $region12: #{tpu_custom_call.1} parent=5 // pred_fallthru
        _
      %p243 = scmp.lt.s32.totalorder %s20, 2
      // Predicated region
      $region33: #{tpu_custom_call.1} parent=5 // pred_check
        %p244 = pneg %p243
      $region34: #{tpu_custom_call.1} parent=5 // pred_check_branch
        %246 = sbr.rel (%p244) target = $region36
      $region35: #{tpu_custom_call.1} parent=5 // pred_region
        // Predicated region
        $region37: #{tpu_custom_call.1} parent=35 // pred_check
          %p247 = pneg %p40
        $region38: #{tpu_custom_call.1} parent=35 // pred_check_branch
          %249 = sbr.rel (%p247) target = $region40
        $region39: #{tpu_custom_call.1} parent=35 // pred_region
          %s250 = sand.u32 %s30, 1
          %s251 = scalar_lea.sflag [#allocation4], %s250
          %s252 = sand.u32 %s30, 1
          %s253 = smul.addr %s252, 8
          %s254 = scalar_lea.vmem [#allocation3], %s253
          %256 = vsyncadd %s251, 0
          %s257 = smul.addr %s20, 2
          %s258 = smul.addr %s257, 4
          %s259 = scalar_lea.hbm %s0, %s258
          %s261 = sshll.u32 %s259, 4
          %s262 = int_to_ptr.hbm [resolvable:$true] %s261
          %s263 = sshll.u32 %s254, 4
          %s264 = int_to_ptr.vmem [resolvable:$true] %s263
          %266 = dma.hbm_to_vmem [thread:$0]  %s262, 128, %s264, %s251
        $region40: #{tpu_custom_call.1} parent=35 // pred_fallthru
          _
      $region36: #{tpu_custom_call.1} parent=5 // pred_fallthru
        _
      %p267 = scmp.le.s32.totalorder 1, %s20
      %p268 = scmp.lt.s32.totalorder %s20, 3
      %p269 = pnand %p267, %p268
      %p270 = pneg %p269
      // Predicated region
      $region41: #{tpu_custom_call.1} parent=5 // pred_check
        _
      $region42: #{tpu_custom_call.1} parent=5 // pred_check_branch
        %272 = sbr.rel (%p269) target = $region44
      $region43: #{tpu_custom_call.1} parent=5 // pred_region
        %s273 = ssub.s32 %s20, 1
        %s274 = sand.u32 %s33, 1
        %s275 = scalar_lea.sflag [#allocation4], %s274
        %s276 = sand.u32 %s33, 1
        %s277 = smul.addr %s276, 8
        %s278 = scalar_lea.vmem [#allocation3], %s277
        // Predicated region
        $region45: #{tpu_custom_call.1} parent=43 // pred_check
          %p279 = pneg %p46
        $region46: #{tpu_custom_call.1} parent=43 // pred_check_branch
          %281 = sbr.rel (%p279) target = $region48
        $region47: #{tpu_custom_call.1} parent=43 // pred_region
          %283 = dma.done %s275, 128
        $region48: #{tpu_custom_call.1} parent=43 // pred_fallthru
          _
        // Predicated region
        $region49: #{tpu_custom_call.1} parent=43 // pred_check
          %p284 = pneg %p67
        $region50: #{tpu_custom_call.1} parent=43 // pred_check_branch
          %286 = sbr.rel (%p284) target = $region52
        $region51: #{tpu_custom_call.1} parent=43 // pred_region
          %288 = dma.done [#allocation7], 64
        $region52: #{tpu_custom_call.1} parent=43 // pred_fallthru
          _
        // Predicated region
        $region53: #{tpu_custom_call.1} parent=43 // pred_check
          %p289 = pneg %p88
        $region54: #{tpu_custom_call.1} parent=43 // pred_check_branch
          %291 = sbr.rel (%p289) target = $region56
        $region55: #{tpu_custom_call.1} parent=43 // pred_region
          %293 = dma.done [#allocation7], 64
        $region56: #{tpu_custom_call.1} parent=43 // pred_fallthru
          _
        // Predicated region
        $region57: #{tpu_custom_call.1} parent=43 // pred_check
          %p294 = pneg %p109
        $region58: #{tpu_custom_call.1} parent=43 // pred_check_branch
          %296 = sbr.rel (%p294) target = $region60
        $region59: #{tpu_custom_call.1} parent=43 // pred_region
          %298 = dma.done [#allocation10], 64
        $region60: #{tpu_custom_call.1} parent=43 // pred_fallthru
          _
        // Predicated region
        $region61: #{tpu_custom_call.1} parent=43 // pred_check
          %p299 = pneg %p130
        $region62: #{tpu_custom_call.1} parent=43 // pred_check_branch
          %301 = sbr.rel (%p299) target = $region64
        $region63: #{tpu_custom_call.1} parent=43 // pred_region
          %303 = dma.done [#allocation10], 64
        $region64: #{tpu_custom_call.1} parent=43 // pred_fallthru
          _
        %s304 = sand.u32 %s33, 1
        %s305 = scalar_lea.sflag [#allocation4], %s304
        %s306 = sand.u32 %s33, 1
        %s307 = smul.addr %s306, 8
        %s308 = scalar_lea.vmem [#allocation3], %s307
        %p309 = pneg %p46
        %p310 = pneg %p43
        %p311 = pneg %p67
        %p312 = pneg %p64
        %p313 = pneg %p88
        %p314 = pneg %p85
        %p315 = pneg %p109
        %p316 = pneg %p106
        %p317 = pneg %p130
        %p318 = pneg %p127
        %p319 = pneg %p151
        %p320 = pneg %p148
        %p321 = pneg %p177
        %p322 = pneg %p174
        %s323 = sand.u32 %s164, 1
        %s324 = scalar_lea.sflag [#allocation5], %s323
        %s325 = sand.u32 %s164, 1
        %s326 = smul.addr %s325, 8
        %s327 = scalar_lea.vmem [#allocation12], %s326
        %328 = vst [vmem:[#allocation2] sm:$0xf0] 0.0
        %329 = vst [vmem:[#allocation2 + $0x8] sm:$0xf0] 0.0
        %330 = vst [vmem:[#allocation2 + $0x10] sm:$0xf0] 0.0
        %331 = vst [vmem:[#allocation2 + $0x18] sm:$0xf0] 0.0
        %332 = vst [vmem:[#allocation2 + $0x20] sm:$0xf0] 0.0
        %333 = vst [vmem:[#allocation2 + $0x28] sm:$0xf0] 0.0
        %334 = vst [vmem:[#allocation2 + $0x30] sm:$0xf0] 0.0
        %335 = vst [vmem:[#allocation2 + $0x38] sm:$0xf0] 0.0
        %336 = vst [vmem:[#allocation2 + $0x40] sm:$0xf0] 0.0
        %337 = vst [vmem:[#allocation2 + $0x48] sm:$0xf0] 0.0
        %338 = vst [vmem:[#allocation2 + $0x50] sm:$0xf0] 0.0
        %339 = vst [vmem:[#allocation2 + $0x58] sm:$0xf0] 0.0
        %340 = vst [vmem:[#allocation2 + $0x60] sm:$0xf0] 0.0
        %341 = vst [vmem:[#allocation2 + $0x68] sm:$0xf0] 0.0
        %342 = vst [vmem:[#allocation2 + $0x70] sm:$0xf0] 0.0
        %343 = vst [vmem:[#allocation2 + $0x78] sm:$0xf0] 0.0
        %344 = vst [vmem:[#allocation2 + $0x80] sm:$0xf0] 0.0
        %345 = vst [vmem:[#allocation2 + $0x88] sm:$0xf0] 0.0
        %v346 = vlaneseq
        %v347 = vand.u32 %v346, 127
        %v348 = vadd.s32 %v347, 128
        %v349 = vld [vmem:[%s5] sm:$0x3]
        %v350 = vld [vmem:[%s278] sm:$0xff]
        %352 = vst [vmem:[#allocation1] ss:$2 sm:$0xff] %v350
        %v353 = vld.sshfl [vmem:[#allocation1] sm:$0xff pattern:$0x75316420]
        %v354 = vld.sshfl [vmem:[#allocation1 + $0x8] sm:$0xff pattern:$0x75316420]
        %vm357 = vcmask 1043456
        %v358 = vsel %vm357, %v353, 0.0
        %v359 = vsel %vm357, %v354, 0.0
        %v360 = vadd.f32 %v358, %v359
        %361 = vadd.xlane.f32.xlu0 %v360
        %v362 = vpop.xlane.xlu0 %361
        %v363 = vmul.f32 %v362, 0.00390625
        %v366 = vunpack.c.l.s4 839922192
        %v367 = vunpack.c.0.s8 %v366
        %v368 = vperm.slane %v363, %v367
        %v370 = vsub.f32 %v350, %v368
        %v371 = vmul.f32 %v370, %v370
        %373 = vst [vmem:[#allocation1] ss:$2 sm:$0xff] %v371
        %v374 = vld.sshfl [vmem:[#allocation1] sm:$0xff pattern:$0x75316420]
        %v375 = vld.sshfl [vmem:[#allocation1 + $0x8] sm:$0xff pattern:$0x75316420]
        %v378 = vsel %vm357, %v374, 0.0
        %v379 = vsel %vm357, %v375, 0.0
        %v380 = vadd.f32 %v378, %v379
        %381 = vadd.xlane.f32.xlu0 %v380
        %v382 = vpop.xlane.xlu0 %381
        %v383 = vmul.f32 %v382, 0.00390625
        %v384 = vadd.f32 %v383, 1e-05
        %v385 = vrsqrt.pop %v384
        %v386 = vmul.f32 %v385, %v384
        %v387 = vmul.f32 %v386, %v385
        %v388 = vmul.f32 0.5, %v387
        %v389 = vsub.f32 1.5, %v388
        %v390 = vmul.f32 %v385, %v389
        %vm391 = vweird.f32 %v384
        %vm392 = vweird.f32 %v385
        %vm393 = vmor %vm391, %vm392
        %v394 = vsel %vm393, %v385, %v390
        %v397 = vunpack.c.l.s4 839922192
        %v398 = vunpack.c.0.s8 %v397
        %v399 = vperm.slane %v394, %v398
        %v401 = vmul.f32 %v370, %v399
        %v402 = vld [vmem:[#allocation11] sm:$0xf]
        %404 = vset.pattern.permute.xlu0 0
        %405 = vperm.xlu0 %404, %v402
        %v406 = vpop.permute.xlu0 %405
        %v408 = vunpack.c.l.s4 839922192
        %v409 = vunpack.c.0.s8 %v408
        %v410 = vperm.slane %v406, %v409
        %v412 = vmul.f32 %v401, %v410
        %413 = vset.pattern.permute.xlu0 1
        %414 = vperm.xlu0 %413, %v402
        %v415 = vpop.permute.xlu0 %414
        %v417 = vunpack.c.l.s4 839922192
        %v418 = vunpack.c.0.s8 %v417
        %v419 = vperm.slane %v415, %v418
        %v421 = vadd.f32 %v412, %v419
        %v422 = vmax.f32 %v421, 0.0
        %v423 = vld [vmem:[#allocation6] sm:$0xf]
        %425 = vst [vmem:[#allocation1] ss:$2 sm:$0xff] %v422
        %v426 = vld.sshfl [vmem:[#allocation1] sm:$0xff pattern:$0x75316420]
        %v427 = vld.sshfl [vmem:[#allocation1 + $0x8] sm:$0xff pattern:$0x75316420]
        %vm428 = vcmask 31744
        %v430 = vsel %vm428, %v423, 0
        %v432 = vsel %vm357, %v426, 0
        %v434 = vsel %vm357, %v427, 0
        %436 = vmatpush.msra.mxu0 0.0
        %437 = vmatpush.msra.mxu0 0.0
        %438 = vmatpush.msra.mxu0 0.0
        %439 = vmatpush.msra.mxu0 0.0
        %440 = vmatpush.msra.mxu0 0.0
        %441 = vmatpush.msra.mxu0 0.0
        %442 = vmatpush.msra.mxu0 0.0
        %443 = vmatpush.msra.mxu0 0.0
        %444 = vmatpush.msra.mxu0 0.0
        %445 = vmatpush.msra.mxu0 0.0
        %446 = vmatpush.msra.mxu0 0.0
        %447 = vmatpush.msra.mxu0 0.0
        %448 = vmatpush.msra.mxu0 0.0
        %449 = vmatpush.msra.mxu0 0.0
        %450 = vmatpush.msra.mxu0 0.0
        %451 = vmatpush.msra.mxu0 %v432
        %452 = vmatmul.f32.gmra.mxu0 %v430
        %v453 = vpop.f32.mrf.mxu0
        %v454 = vadd.f32 0.0, %v453
        %455 = vdwg.mxu0
        %456 = vmatpush.msra.mxu0 0.0
        %457 = vmatpush.msra.mxu0 0.0
        %458 = vmatpush.msra.mxu0 0.0
        %459 = vmatpush.msra.mxu0 0.0
        %460 = vmatpush.msra.mxu0 0.0
        %461 = vmatpush.msra.mxu0 0.0
        %462 = vmatpush.msra.mxu0 0.0
        %463 = vmatpush.msra.mxu0 0.0
        %464 = vmatpush.msra.mxu0 0.0
        %465 = vmatpush.msra.mxu0 0.0
        %466 = vmatpush.msra.mxu0 0.0
        %467 = vmatpush.msra.mxu0 0.0
        %468 = vmatpush.msra.mxu0 0.0
        %469 = vmatpush.msra.mxu0 0.0
        %470 = vmatpush.msra.mxu0 0.0
        %471 = vmatpush.msra.mxu0 %v434
        %472 = vmatmul.f32.gmra.mxu0 %v430
        %v473 = vpop.f32.mrf.mxu0
        %v474 = vadd.f32 0.0, %v473
        %475 = vdwg.mxu0
        %v478 = vrot.slane %v474, 4
        %v479 = vsel %vm357, %v454, %v478
        %v481 = vadd.f32 %v350, %v479
        %482 = vst [vmem:[%s327] sm:$0xff] %v481
        %483 = vset.pattern.permute.xlu0 2
        %484 = vperm.xlu0 %483, %v402
        %v485 = vpop.permute.xlu0 %484
        %v487 = vunpack.c.l.s4 839922192
        %v488 = vunpack.c.0.s8 %v487
        %v489 = vperm.slane %v485, %v488
        %v491 = vmul.f32 %v401, %v489
        %492 = vset.pattern.permute.xlu0 3
        %493 = vperm.xlu0 %492, %v402
        %v494 = vpop.permute.xlu0 %493
        %v496 = vunpack.c.l.s4 839922192
        %v497 = vunpack.c.0.s8 %v496
        %v498 = vperm.slane %v494, %v497
        %v500 = vadd.f32 %v491, %v498
        %v501 = vmax.f32 %v500, 0.0
        %503 = vst [vmem:[#allocation1] ss:$2 sm:$0xff] %v501
        %v504 = vld.sshfl [vmem:[#allocation1] sm:$0xff pattern:$0x75316420]
        %v505 = vld.sshfl [vmem:[#allocation1 + $0x8] sm:$0xff pattern:$0x75316420]
        %508 = vrot.lane.b32.xlu0 %v504, 17
        %v509 = vpop.permute.xlu0 %508
        %510 = vrot.lane.b32.xlu0 %v505, 17
        %v511 = vpop.permute.xlu0 %510
        %vm512 = vcmp.lt.s32.totalorder %v347, 17
        %v513 = vsel %vm512, %v509, %v511
        %v514 = vsel %vm512, %v511, %v509
        %vm515 = vcmp.ge.s32.totalorder %v347, 16
        %vm516 = vcmp.ge.s32.totalorder %v348, 16
        %vm517 = vcmp.ge.s32.totalorder %v349, 1
        %v518 = vsel %vm517, 1, 0
        %v519 = vperm.slane %v518, 0
        %v520 = vperm.slane %v518, 1
        %vm521 = vcmp.ne.s32.totalorder %v519, 0
        %vm522 = vcmp.ne.s32.totalorder %v520, 0
        %vm523 = vmand %vm515, %vm521
        %vm524 = vmand %vm516, %vm522
        %v525 = vsel %vm523, 1, 0
        %v526 = vsel %vm524, 1, 0
        %v527 = vperm.slane %v525, 0
        %v528 = vperm.slane %v526, 0
        %vm529 = vcmp.eq.s32.totalorder %v527, 1
        %vm530 = vcmp.eq.s32.totalorder %v528, 1
        %v531 = vsel %vm529, %v514, 0.0
        %v532 = vsel %vm530, %v513, 0.0
        %533 = vst [vmem:[#allocation2] sm:$0xf] %v531
        %534 = vst [vmem:[#allocation2 + $0x8] sm:$0xf] %v532
        %535 = vst [vmem:[#allocation1] ss:$2 sm:$0xff] %v501
        %v536 = vld.sshfl [vmem:[#allocation1] sm:$0xff pattern:$0x75316420]
        %v537 = vld.sshfl [vmem:[#allocation1 + $0x8] sm:$0xff pattern:$0x75316420]
        %540 = vrot.lane.b32.xlu0 %v536, 16
        %v541 = vpop.permute.xlu0 %540
        %542 = vrot.lane.b32.xlu0 %v537, 16
        %v543 = vpop.permute.xlu0 %542
        %vm544 = vcmp.lt.s32.totalorder %v347, 16
        %v545 = vsel %vm544, %v541, %v543
        %v546 = vsel %vm544, %v543, %v541
        %v547 = vsel %vm515, 1, 0
        %v548 = vsel %vm516, 1, 0
        %vm549 = vcmp.eq.s32.totalorder %v547, 1
        %vm550 = vcmp.eq.s32.totalorder %v548, 1
        %v551 = vsel %vm549, %v546, 0.0
        %v552 = vsel %vm550, %v545, 0.0
        %553 = vst [vmem:[#allocation2 + $0x10] sm:$0xf] %v551
        %554 = vst [vmem:[#allocation2 + $0x18] sm:$0xf] %v552
        %555 = vst [vmem:[#allocation1] ss:$2 sm:$0xff] %v501
        %v556 = vld.sshfl [vmem:[#allocation1] sm:$0xff pattern:$0x75316420]
        %v557 = vld.sshfl [vmem:[#allocation1 + $0x8] sm:$0xff pattern:$0x75316420]
        %560 = vrot.lane.b32.xlu0 %v556, 15
        %v561 = vpop.permute.xlu0 %560
        %562 = vrot.lane.b32.xlu0 %v557, 15
        %v563 = vpop.permute.xlu0 %562
        %vm564 = vcmp.lt.s32.totalorder %v347, 15
        %v565 = vsel %vm564, %v561, %v563
        %v566 = vsel %vm564, %v563, %v561
        %vm567 = vcmp.lt.s32.totalorder %v349, 15
        %v568 = vsel %vm567, 1, 0
        %v569 = vperm.slane %v568, 0
        %v570 = vperm.slane %v568, 1
        %vm571 = vcmp.ne.s32.totalorder %v569, 0
        %vm572 = vcmp.ne.s32.totalorder %v570, 0
        %vm573 = vmand %vm515, %vm571
        %vm574 = vmand %vm516, %vm572
        %v575 = vsel %vm573, 1, 0
        %v576 = vsel %vm574, 1, 0
        %v577 = vperm.slane %v575, 0
        %v578 = vperm.slane %v576, 0
        %vm579 = vcmp.eq.s32.totalorder %v577, 1
        %vm580 = vcmp.eq.s32.totalorder %v578, 1
        %v581 = vsel %vm579, %v566, 0.0
        %v582 = vsel %vm580, %v565, 0.0
        %583 = vst [vmem:[#allocation2 + $0x20] sm:$0xf] %v581
        %584 = vst [vmem:[#allocation2 + $0x28] sm:$0xf] %v582
        %585 = vst [vmem:[#allocation1] ss:$2 sm:$0xff] %v501
        %v586 = vld.sshfl [vmem:[#allocation1] sm:$0xff pattern:$0x75316420]
        %v587 = vld.sshfl [vmem:[#allocation1 + $0x8] sm:$0xff pattern:$0x75316420]
        %590 = vrot.lane.b32.xlu0 %v586, 1
        %v591 = vpop.permute.xlu0 %590
        %592 = vrot.lane.b32.xlu0 %v587, 1
        %v593 = vpop.permute.xlu0 %592
        %vm594 = vcmp.lt.s32.totalorder %v347, 1
        %v595 = vsel %vm594, %v591, %v593
        %v596 = vsel %vm594, %v593, %v591
        %vm597 = vcmp.eq.s32.totalorder %v519, 1
        %vm598 = vcmp.eq.s32.totalorder %v520, 1
        %v599 = vsel %vm597, %v596, 0.0
        %v600 = vsel %vm598, %v595, 0.0
        %601 = vst [vmem:[#allocation2 + $0x30] sm:$0xf] %v599
        %602 = vst [vmem:[#allocation2 + $0x38] sm:$0xf] %v600
        %603 = vst [vmem:[#allocation1] ss:$2 sm:$0xff] %v501
        %v604 = vld.sshfl [vmem:[#allocation1] sm:$0xff pattern:$0x75316420]
        %v605 = vld.sshfl [vmem:[#allocation1 + $0x8] sm:$0xff pattern:$0x75316420]
        %608 = vst [vmem:[#allocation2 + $0x40] sm:$0xf] %v604
        %609 = vst [vmem:[#allocation2 + $0x48] sm:$0xf] %v605
        %610 = vst [vmem:[#allocation1] ss:$2 sm:$0xff] %v501
        %v611 = vld.sshfl [vmem:[#allocation1] sm:$0xff pattern:$0x75316420]
        %v612 = vld.sshfl [vmem:[#allocation1 + $0x8] sm:$0xff pattern:$0x75316420]
        %615 = vrot.lane.b32.xlu0 %v611, 127
        %v616 = vpop.permute.xlu0 %615
        %617 = vrot.lane.b32.xlu0 %v612, 127
        %v618 = vpop.permute.xlu0 %617
        %vm619 = vcmp.lt.s32.totalorder %v347, 127
        %v620 = vsel %vm619, %v616, %v618
        %v621 = vsel %vm619, %v618, %v616
        %vm622 = vcmp.eq.s32.totalorder %v569, 1
        %vm623 = vcmp.eq.s32.totalorder %v570, 1
        %v624 = vsel %vm622, %v620, 0.0
        %v625 = vsel %vm623, %v621, 0.0
        %626 = vst [vmem:[#allocation2 + $0x50] sm:$0xf] %v624
        %627 = vst [vmem:[#allocation2 + $0x58] sm:$0xf] %v625
        %628 = vst [vmem:[#allocation1] ss:$2 sm:$0xff] %v501
        %v629 = vld.sshfl [vmem:[#allocation1] sm:$0xff pattern:$0x75316420]
        %v630 = vld.sshfl [vmem:[#allocation1 + $0x8] sm:$0xff pattern:$0x75316420]
        %633 = vrot.lane.b32.xlu0 %v629, 113
        %v634 = vpop.permute.xlu0 %633
        %635 = vrot.lane.b32.xlu0 %v630, 113
        %v636 = vpop.permute.xlu0 %635
        %vm637 = vcmp.lt.s32.totalorder %v347, 113
        %v638 = vsel %vm637, %v634, %v636
        %v639 = vsel %vm637, %v636, %v634
        %vm640 = vcmp.lt.s32.totalorder %v347, 240
        %vm641 = vcmp.lt.s32.totalorder %v348, 240
        %vm642 = vmand %vm640, %vm521
        %vm643 = vmand %vm641, %vm522
        %v644 = vsel %vm642, 1, 0
        %v645 = vsel %vm643, 1, 0
        %v646 = vperm.slane %v644, 0
        %v647 = vperm.slane %v645, 0
        %vm648 = vcmp.eq.s32.totalorder %v646, 1
        %vm649 = vcmp.eq.s32.totalorder %v647, 1
        %v650 = vsel %vm648, %v638, 0.0
        %v651 = vsel %vm649, %v639, 0.0
        %652 = vst [vmem:[#allocation2 + $0x60] sm:$0xf] %v650
        %653 = vst [vmem:[#allocation2 + $0x68] sm:$0xf] %v651
        %654 = vst [vmem:[#allocation1] ss:$2 sm:$0xff] %v501
        %v655 = vld.sshfl [vmem:[#allocation1] sm:$0xff pattern:$0x75316420]
        %v656 = vld.sshfl [vmem:[#allocation1 + $0x8] sm:$0xff pattern:$0x75316420]
        %659 = vrot.lane.b32.xlu0 %v655, 112
        %v660 = vpop.permute.xlu0 %659
        %661 = vrot.lane.b32.xlu0 %v656, 112
        %v662 = vpop.permute.xlu0 %661
        %vm663 = vcmp.lt.s32.totalorder %v347, 112
        %v664 = vsel %vm663, %v660, %v662
        %v665 = vsel %vm663, %v662, %v660
        %v666 = vsel %vm640, 1, 0
        %v667 = vsel %vm641, 1, 0
        %vm668 = vcmp.eq.s32.totalorder %v666, 1
        %vm669 = vcmp.eq.s32.totalorder %v667, 1
        %v670 = vsel %vm668, %v664, 0.0
        %v671 = vsel %vm669, %v665, 0.0
        %672 = vst [vmem:[#allocation2 + $0x70] sm:$0xf] %v670
        %673 = vst [vmem:[#allocation2 + $0x78] sm:$0xf] %v671
        %674 = vst [vmem:[#allocation1] ss:$2 sm:$0xff] %v501
        %v675 = vld.sshfl [vmem:[#allocation1] sm:$0xff pattern:$0x75316420]
        %v676 = vld.sshfl [vmem:[#allocation1 + $0x8] sm:$0xff pattern:$0x75316420]
        %679 = vrot.lane.b32.xlu0 %v675, 111
        %v680 = vpop.permute.xlu0 %679
        %681 = vrot.lane.b32.xlu0 %v676, 111
        %v682 = vpop.permute.xlu0 %681
        %vm683 = vcmp.lt.s32.totalorder %v347, 111
        %v684 = vsel %vm683, %v680, %v682
        %v685 = vsel %vm683, %v682, %v680
        %vm686 = vmand %vm640, %vm571
        %vm687 = vmand %vm641, %vm572
        %v688 = vsel %vm686, 1, 0
        %v689 = vsel %vm687, 1, 0
        %v690 = vperm.slane %v688, 0
        %v691 = vperm.slane %v689, 0
        %vm692 = vcmp.eq.s32.totalorder %v690, 1
        %vm693 = vcmp.eq.s32.totalorder %v691, 1
        %v694 = vsel %vm692, %v684, 0.0
        %v695 = vsel %vm693, %v685, 0.0
        %696 = vst [vmem:[#allocation2 + $0x80] sm:$0xf] %v694
        %697 = vst [vmem:[#allocation2 + $0x88] sm:$0xf] %v695
        %v698 = vld [vmem:[#allocation8] sm:$0xf]
        %v699 = vld [vmem:[#allocation2] sm:$0xff]
        %v700 = vld [vmem:[#allocation2 + $0x8] sm:$0xff]
        %v701 = vld [vmem:[#allocation2 + $0x10] sm:$0xff]
        %v702 = vld [vmem:[#allocation2 + $0x18] sm:$0xff]
        %v703 = vld [vmem:[#allocation2 + $0x20] sm:$0xff]
        %v704 = vld [vmem:[#allocation2 + $0x28] sm:$0xff]
        %v705 = vld [vmem:[#allocation2 + $0x30] sm:$0xff]
        %v706 = vld [vmem:[#allocation2 + $0x38] sm:$0xff]
        %v707 = vld [vmem:[#allocation2 + $0x40] sm:$0xff]
        %v708 = vld [vmem:[#allocation2 + $0x48] sm:$0xff]
        %v709 = vld [vmem:[#allocation2 + $0x50] sm:$0xff]
        %v710 = vld [vmem:[#allocation2 + $0x58] sm:$0xff]
        %v711 = vld [vmem:[#allocation2 + $0x60] sm:$0xff]
        %v712 = vld [vmem:[#allocation2 + $0x68] sm:$0xff]
        %v713 = vld [vmem:[#allocation2 + $0x70] sm:$0xff]
        %v714 = vld [vmem:[#allocation2 + $0x78] sm:$0xff]
        %v715 = vld [vmem:[#allocation2 + $0x80] sm:$0xff]
        %v716 = vld [vmem:[#allocation2 + $0x88] sm:$0xff]
        %vm717 = vcmask 588800
        %v719 = vsel %vm717, %v698, 0
        %721 = vmatpush.msra.mxu0 0.0
        %722 = vmatpush.msra.mxu0 0.0
        %723 = vmatpush.msra.mxu0 0.0
        %724 = vmatpush.msra.mxu0 0.0
        %725 = vmatpush.msra.mxu0 0.0
        %726 = vmatpush.msra.mxu0 0.0
        %727 = vmatpush.msra.mxu0 0.0
        %728 = vmatpush.msra.mxu0 %v715
        %729 = vmatpush.msra.mxu0 %v713
        %730 = vmatpush.msra.mxu0 %v711
        %731 = vmatpush.msra.mxu0 %v709
        %732 = vmatpush.msra.mxu0 %v707
        %733 = vmatpush.msra.mxu0 %v705
        %734 = vmatpush.msra.mxu0 %v703
        %735 = vmatpush.msra.mxu0 %v701
        %736 = vmatpush.msra.mxu0 %v699
        %737 = vmatmul.f32.gmra.mxu0 %v719
        %v738 = vpop.f32.mrf.mxu0
        %v739 = vadd.f32 0.0, %v738
        %740 = vdwg.mxu0
        %741 = vmatpush.msra.mxu0 0.0
        %742 = vmatpush.msra.mxu0 0.0
        %743 = vmatpush.msra.mxu0 0.0
        %744 = vmatpush.msra.mxu0 0.0
        %745 = vmatpush.msra.mxu0 0.0
        %746 = vmatpush.msra.mxu0 0.0
        %747 = vmatpush.msra.mxu0 0.0
        %748 = vmatpush.msra.mxu0 %v716
        %749 = vmatpush.msra.mxu0 %v714
        %750 = vmatpush.msra.mxu0 %v712
        %751 = vmatpush.msra.mxu0 %v710
        %752 = vmatpush.msra.mxu0 %v708
        %753 = vmatpush.msra.mxu0 %v706
        %754 = vmatpush.msra.mxu0 %v704
        %755 = vmatpush.msra.mxu0 %v702
        %756 = vmatpush.msra.mxu0 %v700
        %757 = vmatmul.f32.gmra.mxu0 %v719
        %v758 = vpop.f32.mrf.mxu0
        %v759 = vadd.f32 0.0, %v758
        %760 = vdwg.mxu0
        %v761 = vsel %vm357, %v739, 0.0
        %v762 = vsel %vm357, %v759, 0.0
        %v763 = vadd.f32 %v761, %v762
        %764 = vadd.xlane.f32.xlu0 %v763
        %v765 = vpop.xlane.xlu0 %764
        %v766 = vmul.f32 %v765, 0.00390625
        %v767 = vsub.f32 %v739, %v766
        %v768 = vsub.f32 %v759, %v766
        %v769 = vmul.f32 %v767, %v767
        %v770 = vmul.f32 %v768, %v768
        %v771 = vsel %vm357, %v769, 0.0
        %v772 = vsel %vm357, %v770, 0.0
        %v773 = vadd.f32 %v771, %v772
        %774 = vadd.xlane.f32.xlu0 %v773
        %v775 = vpop.xlane.xlu0 %774
        %v776 = vmul.f32 %v775, 0.00390625
        %v777 = vadd.f32 %v776, 1e-05
        %v778 = vrsqrt.pop %v777
        %v779 = vmul.f32 %v778, %v777
        %v780 = vmul.f32 %v779, %v778
        %v781 = vmul.f32 0.5, %v780
        %v782 = vsub.f32 1.5, %v781
        %v783 = vmul.f32 %v778, %v782
        %vm784 = vweird.f32 %v777
        %vm785 = vweird.f32 %v778
        %vm786 = vmor %vm784, %vm785
        %v787 = vsel %vm786, %v778, %v783
        %v788 = vmul.f32 %v767, %v787
        %v789 = vmul.f32 %v768, %v787
        %790 = vset.pattern.permute.xlu0 4
        %791 = vperm.xlu0 %790, %v402
        %v792 = vpop.permute.xlu0 %791
        %v794 = vmul.f32 %v788, %v792
        %v795 = vmul.f32 %v789, %v792
        %796 = vset.pattern.permute.xlu0 5
        %797 = vperm.xlu0 %796, %v402
        %v798 = vpop.permute.xlu0 %797
        %v800 = vadd.f32 %v794, %v798
        %v801 = vadd.f32 %v795, %v798
        %v802 = vmax.f32 %v800, 0.0
        %v803 = vmax.f32 %v801, 0.0
        %804 = vrot.lane.b32.xlu0 %v802, 34
        %v805 = vpop.permute.xlu0 %804
        %806 = vrot.lane.b32.xlu0 %v803, 34
        %v807 = vpop.permute.xlu0 %806
        %vm808 = vcmp.lt.s32.totalorder %v347, 34
        %v809 = vsel %vm808, %v805, %v807
        %v810 = vsel %vm808, %v807, %v805
        %vm811 = vcmp.ge.s32.totalorder %v347, 32
        %vm812 = vcmp.ge.s32.totalorder %v348, 32
        %vm813 = vcmp.ge.s32.totalorder %v349, 2
        %v814 = vsel %vm813, 1, 0
        %v815 = vperm.slane %v814, 0
        %v816 = vperm.slane %v814, 1
        %vm817 = vcmp.ne.s32.totalorder %v815, 0
        %vm818 = vcmp.ne.s32.totalorder %v816, 0
        %vm819 = vmand %vm811, %vm817
        %vm820 = vmand %vm812, %vm818
        %v821 = vsel %vm819, 1, 0
        %v822 = vsel %vm820, 1, 0
        %v823 = vperm.slane %v821, 0
        %v824 = vperm.slane %v822, 0
        %vm825 = vcmp.eq.s32.totalorder %v823, 1
        %vm826 = vcmp.eq.s32.totalorder %v824, 1
        %v827 = vsel %vm825, %v810, 0.0
        %v828 = vsel %vm826, %v809, 0.0
        %829 = vst [vmem:[#allocation2] sm:$0xf] %v827
        %830 = vst [vmem:[#allocation2 + $0x8] sm:$0xf] %v828
        %831 = vrot.lane.b32.xlu0 %v802, 32
        %v832 = vpop.permute.xlu0 %831
        %833 = vrot.lane.b32.xlu0 %v803, 32
        %v834 = vpop.permute.xlu0 %833
        %vm835 = vcmp.lt.s32.totalorder %v347, 32
        %v836 = vsel %vm835, %v832, %v834
        %v837 = vsel %vm835, %v834, %v832
        %v838 = vsel %vm811, 1, 0
        %v839 = vsel %vm812, 1, 0
        %vm840 = vcmp.eq.s32.totalorder %v838, 1
        %vm841 = vcmp.eq.s32.totalorder %v839, 1
        %v842 = vsel %vm840, %v837, 0.0
        %v843 = vsel %vm841, %v836, 0.0
        %844 = vst [vmem:[#allocation2 + $0x10] sm:$0xf] %v842
        %845 = vst [vmem:[#allocation2 + $0x18] sm:$0xf] %v843
        %846 = vrot.lane.b32.xlu0 %v802, 30
        %v847 = vpop.permute.xlu0 %846
        %848 = vrot.lane.b32.xlu0 %v803, 30
        %v849 = vpop.permute.xlu0 %848
        %vm850 = vcmp.lt.s32.totalorder %v347, 30
        %v851 = vsel %vm850, %v847, %v849
        %v852 = vsel %vm850, %v849, %v847
        %vm853 = vcmp.lt.s32.totalorder %v349, 14
        %v854 = vsel %vm853, 1, 0
        %v855 = vperm.slane %v854, 0
        %v856 = vperm.slane %v854, 1
        %vm857 = vcmp.ne.s32.totalorder %v855, 0
        %vm858 = vcmp.ne.s32.totalorder %v856, 0
        %vm859 = vmand %vm811, %vm857
        %vm860 = vmand %vm812, %vm858
        %v861 = vsel %vm859, 1, 0
        %v862 = vsel %vm860, 1, 0
        %v863 = vperm.slane %v861, 0
        %v864 = vperm.slane %v862, 0
        %vm865 = vcmp.eq.s32.totalorder %v863, 1
        %vm866 = vcmp.eq.s32.totalorder %v864, 1
        %v867 = vsel %vm865, %v852, 0.0
        %v868 = vsel %vm866, %v851, 0.0
        %869 = vst [vmem:[#allocation2 + $0x20] sm:$0xf] %v867
        %870 = vst [vmem:[#allocation2 + $0x28] sm:$0xf] %v868
        %871 = vrot.lane.b32.xlu0 %v802, 2
        %v872 = vpop.permute.xlu0 %871
        %873 = vrot.lane.b32.xlu0 %v803, 2
        %v874 = vpop.permute.xlu0 %873
        %vm875 = vcmp.lt.s32.totalorder %v347, 2
        %v876 = vsel %vm875, %v872, %v874
        %v877 = vsel %vm875, %v874, %v872
        %vm878 = vcmp.eq.s32.totalorder %v815, 1
        %vm879 = vcmp.eq.s32.totalorder %v816, 1
        %v880 = vsel %vm878, %v877, 0.0
        %v881 = vsel %vm879, %v876, 0.0
        %882 = vst [vmem:[#allocation2 + $0x30] sm:$0xf] %v880
        %883 = vst [vmem:[#allocation2 + $0x38] sm:$0xf] %v881
        %884 = vst [vmem:[#allocation2 + $0x40] sm:$0xf] %v802
        %885 = vst [vmem:[#allocation2 + $0x48] sm:$0xf] %v803
        %886 = vrot.lane.b32.xlu0 %v802, 126
        %v887 = vpop.permute.xlu0 %886
        %888 = vrot.lane.b32.xlu0 %v803, 126
        %v889 = vpop.permute.xlu0 %888
        %vm890 = vcmp.lt.s32.totalorder %v347, 126
        %v891 = vsel %vm890, %v887, %v889
        %v892 = vsel %vm890, %v889, %v887
        %vm893 = vcmp.eq.s32.totalorder %v855, 1
        %vm894 = vcmp.eq.s32.totalorder %v856, 1
        %v895 = vsel %vm893, %v891, 0.0
        %v896 = vsel %vm894, %v892, 0.0
        %897 = vst [vmem:[#allocation2 + $0x50] sm:$0xf] %v895
        %898 = vst [vmem:[#allocation2 + $0x58] sm:$0xf] %v896
        %899 = vrot.lane.b32.xlu0 %v802, 98
        %v900 = vpop.permute.xlu0 %899
        %901 = vrot.lane.b32.xlu0 %v803, 98
        %v902 = vpop.permute.xlu0 %901
        %vm903 = vcmp.lt.s32.totalorder %v347, 98
        %v904 = vsel %vm903, %v900, %v902
        %v905 = vsel %vm903, %v902, %v900
        %vm906 = vcmp.lt.s32.totalorder %v347, 224
        %vm907 = vcmp.lt.s32.totalorder %v348, 224
        %vm908 = vmand %vm906, %vm817
        %vm909 = vmand %vm907, %vm818
        %v910 = vsel %vm908, 1, 0
        %v911 = vsel %vm909, 1, 0
        %v912 = vperm.slane %v910, 0
        %v913 = vperm.slane %v911, 0
        %vm914 = vcmp.eq.s32.totalorder %v912, 1
        %vm915 = vcmp.eq.s32.totalorder %v913, 1
        %v916 = vsel %vm914, %v904, 0.0
        %v917 = vsel %vm915, %v905, 0.0
        %918 = vst [vmem:[#allocation2 + $0x60] sm:$0xf] %v916
        %919 = vst [vmem:[#allocation2 + $0x68] sm:$0xf] %v917
        %920 = vrot.lane.b32.xlu0 %v802, 96
        %v921 = vpop.permute.xlu0 %920
        %922 = vrot.lane.b32.xlu0 %v803, 96
        %v923 = vpop.permute.xlu0 %922
        %vm924 = vcmp.lt.s32.totalorder %v347, 96
        %v925 = vsel %vm924, %v921, %v923
        %v926 = vsel %vm924, %v923, %v921
        %v927 = vsel %vm906, 1, 0
        %v928 = vsel %vm907, 1, 0
        %vm929 = vcmp.eq.s32.totalorder %v927, 1
        %vm930 = vcmp.eq.s32.totalorder %v928, 1
        %v931 = vsel %vm929, %v925, 0.0
        %v932 = vsel %vm930, %v926, 0.0
        %933 = vst [vmem:[#allocation2 + $0x70] sm:$0xf] %v931
        %934 = vst [vmem:[#allocation2 + $0x78] sm:$0xf] %v932
        %935 = vrot.lane.b32.xlu0 %v802, 94
        %v936 = vpop.permute.xlu0 %935
        %937 = vrot.lane.b32.xlu0 %v803, 94
        %v938 = vpop.permute.xlu0 %937
        %vm939 = vcmp.lt.s32.totalorder %v347, 94
        %v940 = vsel %vm939, %v936, %v938
        %v941 = vsel %vm939, %v938, %v936
        %vm942 = vmand %vm906, %vm857
        %vm943 = vmand %vm907, %vm858
        %v944 = vsel %vm942, 1, 0
        %v945 = vsel %vm943, 1, 0
        %v946 = vperm.slane %v944, 0
        %v947 = vperm.slane %v945, 0
        %vm948 = vcmp.eq.s32.totalorder %v946, 1
        %vm949 = vcmp.eq.s32.totalorder %v947, 1
        %v950 = vsel %vm948, %v940, 0.0
        %v951 = vsel %vm949, %v941, 0.0
        %952 = vst [vmem:[#allocation2 + $0x80] sm:$0xf] %v950
        %953 = vst [vmem:[#allocation2 + $0x88] sm:$0xf] %v951
        %v954 = vld [vmem:[#allocation9] sm:$0xf]
        %v955 = vld [vmem:[#allocation2] sm:$0xff]
        %v956 = vld [vmem:[#allocation2 + $0x8] sm:$0xff]
        %v957 = vld [vmem:[#allocation2 + $0x10] sm:$0xff]
        %v958 = vld [vmem:[#allocation2 + $0x18] sm:$0xff]
        %v959 = vld [vmem:[#allocation2 + $0x20] sm:$0xff]
        %v960 = vld [vmem:[#allocation2 + $0x28] sm:$0xff]
        %v961 = vld [vmem:[#allocation2 + $0x30] sm:$0xff]
        %v962 = vld [vmem:[#allocation2 + $0x38] sm:$0xff]
        %v963 = vld [vmem:[#allocation2 + $0x40] sm:$0xff]
        %v964 = vld [vmem:[#allocation2 + $0x48] sm:$0xff]
        %v965 = vld [vmem:[#allocation2 + $0x50] sm:$0xff]
        %v966 = vld [vmem:[#allocation2 + $0x58] sm:$0xff]
        %v967 = vld [vmem:[#allocation2 + $0x60] sm:$0xff]
        %v968 = vld [vmem:[#allocation2 + $0x68] sm:$0xff]
        %v969 = vld [vmem:[#allocation2 + $0x70] sm:$0xff]
        %v970 = vld [vmem:[#allocation2 + $0x78] sm:$0xff]
        %v971 = vld [vmem:[#allocation2 + $0x80] sm:$0xff]
        %v972 = vld [vmem:[#allocation2 + $0x88] sm:$0xff]
        %v974 = vsel %vm717, %v954, 0
        %976 = vmatpush.msra.mxu0 0.0
        %977 = vmatpush.msra.mxu0 0.0
        %978 = vmatpush.msra.mxu0 0.0
        %979 = vmatpush.msra.mxu0 0.0
        %980 = vmatpush.msra.mxu0 0.0
        %981 = vmatpush.msra.mxu0 0.0
        %982 = vmatpush.msra.mxu0 0.0
        %983 = vmatpush.msra.mxu0 %v971
        %984 = vmatpush.msra.mxu0 %v969
        %985 = vmatpush.msra.mxu0 %v967
        %986 = vmatpush.msra.mxu0 %v965
        %987 = vmatpush.msra.mxu0 %v963
        %988 = vmatpush.msra.mxu0 %v961
        %989 = vmatpush.msra.mxu0 %v959
        %990 = vmatpush.msra.mxu0 %v957
        %991 = vmatpush.msra.mxu0 %v955
        %992 = vmatmul.f32.gmra.mxu0 %v974
        %v993 = vpop.f32.mrf.mxu0
        %v994 = vadd.f32 0.0, %v993
        %995 = vdwg.mxu0
        %996 = vmatpush.msra.mxu0 0.0
        %997 = vmatpush.msra.mxu0 0.0
        %998 = vmatpush.msra.mxu0 0.0
        %999 = vmatpush.msra.mxu0 0.0
        %1000 = vmatpush.msra.mxu0 0.0
        %1001 = vmatpush.msra.mxu0 0.0
        %1002 = vmatpush.msra.mxu0 0.0
        %1003 = vmatpush.msra.mxu0 %v972
        %1004 = vmatpush.msra.mxu0 %v970
        %1005 = vmatpush.msra.mxu0 %v968
        %1006 = vmatpush.msra.mxu0 %v966
        %1007 = vmatpush.msra.mxu0 %v964
        %1008 = vmatpush.msra.mxu0 %v962
        %1009 = vmatpush.msra.mxu0 %v960
        %1010 = vmatpush.msra.mxu0 %v958
        %1011 = vmatpush.msra.mxu0 %v956
        %1012 = vmatmul.f32.gmra.mxu0 %v974
        %v1013 = vpop.f32.mrf.mxu0
        %v1014 = vadd.f32 0.0, %v1013
        %1015 = vdwg.mxu0
        %v1016 = vld [vmem:[%s327] sm:$0xff]
        %v1019 = vrot.slane %v1014, 4
        %v1020 = vsel %vm357, %v994, %v1019
        %v1022 = vadd.f32 %v1016, %v1020
        %1023 = vst [vmem:[%s327] sm:$0xff] %v1022
        %s1024 = sand.u32 %s164, 1
        %s1025 = scalar_lea.sflag [#allocation5], %s1024
        %s1026 = sand.u32 %s164, 1
        %s1027 = smul.addr %s1026, 8
        %s1028 = scalar_lea.vmem [#allocation12], %s1027
        // Predicated region
        $region65: #{tpu_custom_call.1} parent=43 // pred_check
          %p1029 = pneg %p174
        $region66: #{tpu_custom_call.1} parent=43 // pred_check_branch
          %1031 = sbr.rel (%p1029) target = $region68
        $region67: #{tpu_custom_call.1} parent=43 // pred_region
          %1033 = vsyncadd %s1025, 0
          %s1034 = smul.addr %s25, 2
          %s1035 = smul.addr %s1034, 4
          %s1036 = scalar_lea.hbm %s6, %s1035
          %s1038 = sshll.u32 %s1028, 4
          %s1039 = int_to_ptr.vmem [resolvable:$true] %s1038
          %s1040 = sshll.u32 %s1036, 4
          %s1041 = int_to_ptr.hbm [resolvable:$true] %s1040
          %1043 = dma.vmem_to_hbm [thread:$0]  %s1039, 128, %s1041, %s1025
        $region68: #{tpu_custom_call.1} parent=43 // pred_fallthru
          _
      $region44: #{tpu_custom_call.1} parent=5 // pred_fallthru
        _
      %p1044 = scmp.le.s32.totalorder 2, %s20
      // Predicated region
      $region69: #{tpu_custom_call.1} parent=5 // pred_check
        %p1045 = pneg %p1044
      $region70: #{tpu_custom_call.1} parent=5 // pred_check_branch
        %1047 = sbr.rel (%p1045) target = $region72
      $region71: #{tpu_custom_call.1} parent=5 // pred_region
        %s1048 = ssub.s32 %s20, 2
        // Predicated region
        $region73: #{tpu_custom_call.1} parent=71 // pred_check
          %p1049 = pneg %p180
        $region74: #{tpu_custom_call.1} parent=71 // pred_check_branch
          %1051 = sbr.rel (%p1049) target = $region76
        $region75: #{tpu_custom_call.1} parent=71 // pred_region
          %s1052 = sand.u32 %s165, 1
          %s1053 = scalar_lea.sflag [#allocation5], %s1052
          %s1054 = sand.u32 %s165, 1
          %s1055 = smul.addr %s1054, 8
          %s1056 = scalar_lea.vmem [#allocation12], %s1055
          %1058 = dma.done %s1053, 128
        $region76: #{tpu_custom_call.1} parent=71 // pred_fallthru
          _
      $region72: #{tpu_custom_call.1} parent=5 // pred_fallthru
        _
    $region6: #{tpu_custom_call.1} parent=1 // loop_footer
      %s24 = sadd.s32 1, %s20
    $region7: #{tpu_custom_call.1} parent=1 // loop_footer_branch
      %19 = sbr.rel target = $region3
    $region8: #{tpu_custom_call.1} parent=1 // loop_exit
      _
    %1059 = vsyncpa [#allocation4], 1
    %s1060 = scalar_lea.sflag [#allocation4], 1
    %1061 = vsyncpa %s1060, 1
    %1062 = vsyncpa [#allocation7], 1
    %1063 = vsyncpa [#allocation10], 1
    %1064 = vsyncpa [#allocation5], 1
    %s1065 = scalar_lea.sflag [#allocation5], 1
    %1066 = vsyncpa %s1065, 1

</llo_original>
